<compile_context>
chip_gen: v7x
topology: tpu7x:2x2x1
jax: 0.10.0
libtpu: 0.0.40
codegen_flags: <defaults>
</compile_context>

<pallas_src>
from functools import partial

import jax
import jax.numpy as jnp
import numpy as np
from jax.experimental import pallas as pl
from jax.experimental.pallas import tpu as pltpu


def masker_kernel(hidden_ref, emb_ref, ev_ref, wt_ref, b_ref, ph_ref,
                  mwl_ref, mix_ref, *, mix_f32):
    """One token tile: hidden/emb [Tt,D] bf16, ev [Tt,1] f32 (tokens on sublanes)."""
    h = hidden_ref[...]                       # [Tt, D] bf16 (native MXU LHS)
    ev = ev_ref[...]                          # [Tt, 1] f32
    wt = wt_ref[...]                          # [D, 2]  bf16, cols = [w1-w0, w1]
    b = b_ref[...]                            # [1, 2]  f32,  [b1-b0, b1]

    # One MXU dot gives d = l1-l0 (col 0) and l1 (col 1) directly.
    lg = jnp.dot(h, wt, preferred_element_type=jnp.float32) + b       # [Tt, 2]
    # Additive evidence masking on both columns:
    #   col0: d  - pen -> sigmoid == softmax(masked logits)[..., 1]
    #   col1: l1 - pen -> eval-mode "mask" output
    lg = lg - (1.0 - ev) * 1.0e10

    def sig(x):
        # softmax([l0, l1], -1)[..., 1] == sigmoid(l1 - l0); the clip keeps
        # masked (-1e10) tokens finite; sigmoid(-30) ~ 9e-14 ~ 0.
        return pl.reciprocal(1.0 + jnp.exp(-jnp.clip(x, -30.0, 30.0)), approx=True)

    # Mix weight stays in token-on-sublane (column) layout: no relayout needed
    # for the broadcast over D below.
    mw_col = sig(lg[:, 0:1])                  # [Tt, 1] f32

    # Per-token outputs: one small transpose to a lane-dense [2, Tt] store.
    lg_t = jnp.transpose(lg)                  # [2, Tt]
    mwl_ref[0:1, :] = sig(lg_t[0:1, :])       # mask_weights
    mwl_ref[1:2, :] = lg_t[1:2, :]            # masked logits[:, :, 1]

    # mix = emb + w * (ph - emb)
    emb = emb_ref[...]                        # [Tt, D] bf16
    ph = ph_ref[...]                          # [1, D]  f32
    if mix_f32:
        # v5e: no bf16 VALU -> keep elementwise math in f32.
        e32 = emb.astype(jnp.float32)
        mix_ref[...] = (e32 + mw_col * (ph - e32)).astype(mix_ref.dtype)
    else:
        # v6e / v7x: native bf16 VALU -> halve elementwise footprint.
        phb = ph.astype(jnp.bfloat16)
        mix_ref[...] = (emb + mw_col.astype(jnp.bfloat16) * (phb - emb)
                        ).astype(mix_ref.dtype)


def _tpu_generation():
    try:
        kind = jax.devices()[0].device_kind.lower()
    except Exception:
        return None
    for g in (7, 6, 5, 4):
        if f"v{g}" in kind:
            return g
    return None


def _vmem_capacity_bytes():
    try:
        return int(pltpu.get_tpu_info().vmem_capacity_bytes)
    except Exception:
        pass
    try:
        kind = jax.devices()[0].device_kind.lower()
    except Exception:
        kind = ""
    return (64 if "v7" in kind else 128) * 1024 * 1024


def _pick_token_tile(T, D, budget_bytes, mix_f32, prefer_two_steps):
    # Per-token VMEM high-water estimate (bytes):
    #   double-buffered streams (hidden, emb, mix out): 3 * 2 * D * 2 = 12*D
    #   in-kernel temporaries (ph-emb, mix, casts):     3 * D * {4|2}
    #   per-token scalars (ev, lg, mw, mwl buffers):    ~64
    per_tok = 12 * D + (12 if mix_f32 else 6) * D + 64
    per_tok = (per_tok * 5) // 4              # 25% slack for compiler scratch
    best = best_multi = None
    for t in range(128, T + 1, 128):          # lane-aligned divisors of T
        if T % t or t * per_tok > budget_bytes:
            continue
        best = t
        if T // t >= 2:
            best_multi = t
    if prefer_two_steps and best_multi is not None:
        return best_multi                     # keep both v7x TensorCores busy
    if best is not None:
        return best
    # Tiny / odd T: whole array as one block (block == full dims is always legal).
    return T


def transformer_masker_head(hidden, inputs_embeds, evidence_mask,
                            w_cls, b_cls, ph_embedding, *, token_tile=None):
    """hidden/inputs_embeds: [B,S,D]; evidence_mask: [B,S]; w_cls: [2,D]."""
    B, S, D = hidden.shape
    T = B * S

    # bf16 streams -> native MXU path on all generations (no-op if already bf16).
    if hidden.dtype != jnp.bfloat16:
        hidden = hidden.astype(jnp.bfloat16)
    if inputs_embeds.dtype != jnp.bfloat16:
        inputs_embeds = inputs_embeds.astype(jnp.bfloat16)

    gen = _tpu_generation()
    mix_f32 = gen is not None and gen <= 5            # v5e has no bf16 VALU
    prefer_two_steps = gen is not None and gen >= 7   # v7x: 2 TCs per chip

    vmem_cap = _vmem_capacity_bytes()
    vmem_limit = (vmem_cap * 3) // 4                  # 48 MiB on v7x, 96 MiB v5e/v6e
    budget = max(vmem_limit - 8 * 1024 * 1024, 4 * 1024 * 1024)

    tt = token_tile if token_tile is not None else _pick_token_tile(
        T, D, budget, mix_f32, prefer_two_steps)
    assert T % tt == 0, (T, tt)

    # Flatten (B, S) -> one token axis: free reshapes, larger per-step blocks.
    h2 = hidden.reshape(T, D)
    e2 = inputs_embeds.reshape(T, D)
    ev = evidence_mask.astype(jnp.float32).reshape(T, 1)    # tokens on sublanes

    # Fold the classifier so the dot yields [d, l1] directly; bf16 weights.
    w = jnp.asarray(w_cls, jnp.float32)                     # [2, D]
    wt = jnp.stack([w[1] - w[0], w[1]], axis=1).astype(jnp.bfloat16)   # [D, 2]
    bb = jnp.asarray(b_cls, jnp.float32)
    b2 = jnp.stack([bb[1] - bb[0], bb[1]]).reshape(1, 2)
    ph2 = jnp.asarray(ph_embedding, jnp.float32).reshape(1, D)

    mwl, mix = pl.pallas_call(
        partial(masker_kernel, mix_f32=mix_f32),
        grid_spec=pltpu.PrefetchScalarGridSpec(
            num_scalar_prefetch=0,
            grid=(T // tt,),
            in_specs=[
                pl.BlockSpec((tt, D), lambda i: (i, 0)),   # hidden
                pl.BlockSpec((tt, D), lambda i: (i, 0)),   # inputs_embeds
                pl.BlockSpec((tt, 1), lambda i: (i, 0)),   # evidence_mask (column)
                pl.BlockSpec((D, 2), lambda i: (0, 0)),    # folded W
                pl.BlockSpec((1, 2), lambda i: (0, 0)),    # folded bias
                pl.BlockSpec((1, D), lambda i: (0, 0)),    # ph_embedding
            ],
            out_specs=[
                pl.BlockSpec((2, tt), lambda i: (0, i)),   # [mask_weights; masked l1]
                pl.BlockSpec((tt, D), lambda i: (i, 0)),   # mix_embeds
            ],
        ),
        out_shape=(
            jax.ShapeDtypeStruct((2, T), jnp.float32),
            jax.ShapeDtypeStruct((T, D), inputs_embeds.dtype),
        ),
        compiler_params=pltpu.CompilerParams(
            dimension_semantics=("parallel",),
            vmem_limit_bytes=vmem_limit,
        ),
    )(h2, e2, ev, wt, b2, ph2)

    mask_weights = mwl[0].reshape(B, S)
    masked_logit1 = mwl[1].reshape(B, S)
    return mask_weights, masked_logit1, mix.reshape(B, S, D)


def reference_head(hidden, inputs_embeds, evidence_mask, w_cls, b_cls, ph):
    h = hidden.astype(jnp.float32)
    e = inputs_embeds.astype(jnp.float32)
    logits = jnp.einsum("bsd,od->bso", h, w_cls.astype(jnp.float32),
                        precision=jax.lax.Precision.HIGHEST) + b_cls
    ev = evidence_mask.astype(jnp.float32)
    logits = logits.at[:, :, 1].add(-(1.0 - ev) * 1.0e10)
    mw = jax.nn.softmax(logits, axis=-1)[:, :, 1]
    mix = mw[..., None] * ph[None, None, :] + (1.0 - mw[..., None]) * e
    return mw, logits[:, :, 1], mix


if __name__ == "__main__":
    B, S, D, V = 2, 256, 64, 128

    key = jax.random.PRNGKey(0)
    k_hid, k_ids, k_ev, k_w, k_b, k_ph, k_emb = jax.random.split(key, 7)

    # Stand-in for self.transformer(...)[0] (pretrained AutoModel output).
    # TODO(synk): the HuggingFace encoder / masked_model have no synthetic
    # Pallas equivalent; hidden states are simulated (dropout is eval-mode id).
    hidden = jax.random.normal(k_hid, (B, S, D), jnp.float32).astype(jnp.bfloat16)

    input_ids = jax.random.randint(k_ids, (B, S), 0, V)
    evidence_mask = (jax.random.uniform(k_ev, (B, S)) > 0.5).astype(jnp.float32)
    # Guarantee block_mask = evidence_mask.sum(-1) > 0 for every row
    # (so the data-dependent `remove_inputs` branch is not taken).
    evidence_mask = evidence_mask.at[:, 0].set(1.0)

    # Parameter shapes from __init__: premask_classifier = Linear(D, 2),
    # ph_embedding = rand(d_model).
    w_cls = 0.02 * jax.random.normal(k_w, (2, D), jnp.float32)
    b_cls = 0.02 * jax.random.normal(k_b, (2,), jnp.float32)
    ph_embedding = jax.random.uniform(k_ph, (D,), jnp.float32)

    # embed(ids): input-embedding lookup of the masked model (glue, plain JAX).
    emb_table = 0.02 * jax.random.normal(k_emb, (V, D), jnp.float32)
    inputs_embeds = jnp.take(emb_table, input_ids, axis=0).astype(jnp.bfloat16)

    # TODO(synk): gumbel_softmax / temperature-anneal path needs stateful PRNG
    # noise; the deterministic `use_just_softmax` path is implemented instead.

    mw, logit1, mix = transformer_masker_head(
        hidden, inputs_embeds, evidence_mask, w_cls, b_cls, ph_embedding)
    jax.block_until_ready((mw, logit1, mix))

    mw_r, logit1_r, mix_r = reference_head(
        hidden, inputs_embeds, evidence_mask, w_cls, b_cls, ph_embedding)

    np.testing.assert_allclose(np.asarray(mw), np.asarray(mw_r),
                               rtol=1e-2, atol=1e-2)
    np.testing.assert_allclose(np.asarray(logit1), np.asarray(logit1_r),
                               rtol=1e-3, atol=1e-2)
    np.testing.assert_allclose(np.asarray(mix.astype(jnp.float32)),
                               np.asarray(mix_r), rtol=2e-2, atol=2e-2)

    print("KERNEL_OK")
</pallas_src>

<mosaic_0001>
module attributes {stable_mosaic.version = 11 : i64} {
  func.func @masker_kernel(%arg0: i32, %arg1: memref<512x64xbf16, #tpu.memory_space<vmem>>, %arg2: memref<512x64xbf16, #tpu.memory_space<vmem>>, %arg3: memref<512x1xf32, #tpu.memory_space<vmem>>, %arg4: memref<64x2xbf16, #tpu.memory_space<vmem>>, %arg5: memref<1x2xf32, #tpu.memory_space<vmem>>, %arg6: memref<1x64xf32, #tpu.memory_space<vmem>>, %arg7: memref<2x512xf32, #tpu.memory_space<vmem>>, %arg8: memref<512x64xbf16, #tpu.memory_space<vmem>>) attributes {dimension_semantics = [#tpu.dimension_semantics<parallel>], iteration_bounds = array<i64: 1>, scalar_prefetch = 0 : i64, scratch_operands = 0 : i64, tpu.core_type = #tpu.core_type<tc>, window_params = [{transform_indices = @transform_0, window_bounds = array<i64: 512, 64>}, {transform_indices = @transform_1, window_bounds = array<i64: 512, 64>}, {transform_indices = @transform_2, window_bounds = array<i64: 512, 1>}, {pipeline_mode = #tpu.pipeline_mode<synchronous>, transform_indices = @transform_3, window_bounds = array<i64: 64, 2>}, {pipeline_mode = #tpu.pipeline_mode<synchronous>, transform_indices = @transform_4, window_bounds = array<i64: 1, 2>}, {pipeline_mode = #tpu.pipeline_mode<synchronous>, transform_indices = @transform_5, window_bounds = array<i64: 1, 64>}, {transform_indices = @transform_6, window_bounds = array<i64: 2, 512>}, {transform_indices = @transform_7, window_bounds = array<i64: 512, 64>}]} {
    %c0 = arith.constant 0 : index
    %c0_0 = arith.constant 0 : index
    %0 = vector.load %arg1[%c0, %c0_0] : memref<512x64xbf16, #tpu.memory_space<vmem>>, vector<512x64xbf16>
    %c0_1 = arith.constant 0 : index
    %c0_2 = arith.constant 0 : index
    %1 = vector.load %arg3[%c0_1, %c0_2] : memref<512x1xf32, #tpu.memory_space<vmem>>, vector<512x1xf32>
    %c0_3 = arith.constant 0 : index
    %c0_4 = arith.constant 0 : index
    %2 = vector.load %arg4[%c0_3, %c0_4] : memref<64x2xbf16, #tpu.memory_space<vmem>>, vector<64x2xbf16>
    %c0_5 = arith.constant 0 : index
    %c0_6 = arith.constant 0 : index
    %3 = vector.load %arg5[%c0_5, %c0_6] : memref<1x2xf32, #tpu.memory_space<vmem>>, vector<1x2xf32>
    %cst = arith.constant dense<0.000000e+00> : vector<512x2xf32>
    %4 = tpu.matmul %0, %2, %cst {dimension_numbers = #tpu.dot_dimension_numbers<[1], [0], [0], [1], [0, 0, 1, 1], [], []>} : vector<512x64xbf16>, vector<64x2xbf16>, vector<512x2xf32> -> vector<512x2xf32>
    %5 = vector.broadcast %3 : vector<1x2xf32> to vector<512x2xf32>
    %6 = arith.addf %4, %5 : vector<512x2xf32>
    %cst_7 = arith.constant 1.000000e+00 : f32
    %7 = vector.broadcast %cst_7 : f32 to vector<512x1xf32>
    %8 = arith.subf %7, %1 : vector<512x1xf32>
    %cst_8 = arith.constant 1.000000e+10 : f32
    %9 = vector.broadcast %cst_8 : f32 to vector<512x1xf32>
    %10 = arith.mulf %8, %9 : vector<512x1xf32>
    %11 = vector.broadcast %10 : vector<512x1xf32> to vector<512x2xf32>
    %12 = arith.subf %6, %11 : vector<512x2xf32>
    %13 = vector.extract_strided_slice %12 {offsets = [0, 0], sizes = [512, 1], strides = [1, 1]} : vector<512x2xf32> to vector<512x1xf32>
    %cst_9 = arith.constant -3.000000e+01 : f32
    %cst_10 = arith.constant 3.000000e+01 : f32
    %14 = vector.broadcast %cst_9 : f32 to vector<512x1xf32>
    %15 = arith.maximumf %14, %13 : vector<512x1xf32>
    %16 = vector.broadcast %cst_10 : f32 to vector<512x1xf32>
    %17 = arith.minimumf %16, %15 : vector<512x1xf32>
    %cst_11 = arith.constant 0.000000e+00 : f32
    %18 = vector.broadcast %cst_11 : f32 to vector<512x1xf32>
    %19 = arith.subf %18, %17 : vector<512x1xf32>
    %20 = math.exp %19 : vector<512x1xf32>
    %cst_12 = arith.constant 1.000000e+00 : f32
    %21 = vector.broadcast %cst_12 : f32 to vector<512x1xf32>
    %22 = arith.addf %21, %20 : vector<512x1xf32>
    %23 = tpu.reciprocal %22 {approx = true} : vector<512x1xf32> -> vector<512x1xf32>
    %24 = tpu.transpose %12, [1, 0] : vector<512x2xf32> -> vector<2x512xf32>
    %25 = vector.extract_strided_slice %24 {offsets = [0, 0], sizes = [1, 512], strides = [1, 1]} : vector<2x512xf32> to vector<1x512xf32>
    %cst_13 = arith.constant -3.000000e+01 : f32
    %cst_14 = arith.constant 3.000000e+01 : f32
    %26 = vector.broadcast %cst_13 : f32 to vector<1x512xf32>
    %27 = arith.maximumf %26, %25 : vector<1x512xf32>
    %28 = vector.broadcast %cst_14 : f32 to vector<1x512xf32>
    %29 = arith.minimumf %28, %27 : vector<1x512xf32>
    %cst_15 = arith.constant 0.000000e+00 : f32
    %30 = vector.broadcast %cst_15 : f32 to vector<1x512xf32>
    %31 = arith.subf %30, %29 : vector<1x512xf32>
    %32 = math.exp %31 : vector<1x512xf32>
    %cst_16 = arith.constant 1.000000e+00 : f32
    %33 = vector.broadcast %cst_16 : f32 to vector<1x512xf32>
    %34 = arith.addf %33, %32 : vector<1x512xf32>
    %35 = tpu.reciprocal %34 {approx = true} : vector<1x512xf32> -> vector<1x512xf32>
    %c0_17 = arith.constant 0 : index
    %c0_18 = arith.constant 0 : index
    %36 = vector.load %arg7[%c0_17, %c0_18] : memref<2x512xf32, #tpu.memory_space<vmem>>, vector<1x512xf32>
    tpu.vector_store %arg7[%c0_17, %c0_18], %35 {strides = array<i32>} : memref<2x512xf32, #tpu.memory_space<vmem>>, vector<1x512xf32>,
    %37 = vector.extract_strided_slice %24 {offsets = [1, 0], sizes = [1, 512], strides = [1, 1]} : vector<2x512xf32> to vector<1x512xf32>
    %c1 = arith.constant 1 : index
    %c0_19 = arith.constant 0 : index
    %38 = vector.load %arg7[%c1, %c0_19] : memref<2x512xf32, #tpu.memory_space<vmem>>, vector<1x512xf32>
    tpu.vector_store %arg7[%c1, %c0_19], %37 {strides = array<i32>} : memref<2x512xf32, #tpu.memory_space<vmem>>, vector<1x512xf32>,
    %c0_20 = arith.constant 0 : index
    %c0_21 = arith.constant 0 : index
    %39 = vector.load %arg2[%c0_20, %c0_21] : memref<512x64xbf16, #tpu.memory_space<vmem>>, vector<512x64xbf16>
    %c0_22 = arith.constant 0 : index
    %c0_23 = arith.constant 0 : index
    %40 = vector.load %arg6[%c0_22, %c0_23] : memref<1x64xf32, #tpu.memory_space<vmem>>, vector<1x64xf32>
    %41 = arith.truncf %40 : vector<1x64xf32> to vector<1x64xbf16>
    %42 = arith.truncf %23 : vector<512x1xf32> to vector<512x1xbf16>
    %43 = vector.broadcast %41 : vector<1x64xbf16> to vector<512x64xbf16>
    %44 = arith.subf %43, %39 : vector<512x64xbf16>
    %45 = vector.broadcast %42 : vector<512x1xbf16> to vector<512x64xbf16>
    %46 = arith.mulf %45, %44 : vector<512x64xbf16>
    %47 = arith.addf %39, %46 : vector<512x64xbf16>
    %c0_24 = arith.constant 0 : index
    %c0_25 = arith.constant 0 : index
    %48 = vector.load %arg8[%c0_24, %c0_25] : memref<512x64xbf16, #tpu.memory_space<vmem>>, vector<512x64xbf16>
    tpu.vector_store %arg8[%c0_24, %c0_25], %47 {strides = array<i32>} : memref<512x64xbf16, #tpu.memory_space<vmem>>, vector<512x64xbf16>,
    return
  }
  func.func @transform_0(%arg0: i32) -> (i32, i32) {
    %c0_i32 = arith.constant 0 : i32
    %c0_i32_0 = arith.constant 0 : i32
    return %arg0, %c0_i32 : i32, i32
  }
  func.func @transform_1(%arg0: i32) -> (i32, i32) {
    %c0_i32 = arith.constant 0 : i32
    %c0_i32_0 = arith.constant 0 : i32
    return %arg0, %c0_i32 : i32, i32
  }
  func.func @transform_2(%arg0: i32) -> (i32, i32) {
    %c0_i32 = arith.constant 0 : i32
    %c0_i32_0 = arith.constant 0 : i32
    return %arg0, %c0_i32 : i32, i32
  }
  func.func @transform_3(%arg0: i32) -> (i32, i32) {
    %c0_i32 = arith.constant 0 : i32
    %c0_i32_0 = arith.constant 0 : i32
    %c0_i32_1 = arith.constant 0 : i32
    return %c0_i32, %c0_i32_0 : i32, i32
  }
  func.func @transform_4(%arg0: i32) -> (i32, i32) {
    %c0_i32 = arith.constant 0 : i32
    %c0_i32_0 = arith.constant 0 : i32
    %c0_i32_1 = arith.constant 0 : i32
    return %c0_i32, %c0_i32_0 : i32, i32
  }
  func.func @transform_5(%arg0: i32) -> (i32, i32) {
    %c0_i32 = arith.constant 0 : i32
    %c0_i32_0 = arith.constant 0 : i32
    %c0_i32_1 = arith.constant 0 : i32
    return %c0_i32, %c0_i32_0 : i32, i32
  }
  func.func @transform_6(%arg0: i32) -> (i32, i32) {
    %c0_i32 = arith.constant 0 : i32
    %c0_i32_0 = arith.constant 0 : i32
    return %c0_i32, %arg0 : i32, i32
  }
  func.func @transform_7(%arg0: i32) -> (i32, i32) {
    %c0_i32 = arith.constant 0 : i32
    %c0_i32_0 = arith.constant 0 : i32
    return %arg0, %c0_i32 : i32, i32
  }
}

</mosaic_0001>

<llo_original>
// kernel: tpu_custom_call.1
$region0: #{tpu_custom_call.1}
  #allocation0 [shape = 'u32[]', space=smem, size = 0x4, offset = 0x4, fixed_abs, tag = 'smem constant byte address 0x4 - core index']
  #allocation1 [shape = 'u32[144,128]{1,0:T(1,128)}', space=vmem, size = 0x12000, scoped, tag = 'internal scratch']
  %s0 = inlined_call_operand.hbm [shape: bf16[512,64], index: 0, kind: input, shape index: {}]
  %s1 = inlined_call_operand.hbm [shape: bf16[512,64], index: 1, kind: input, shape index: {}]
  %s2 = inlined_call_operand.hbm [shape: f32[512,1], index: 2, kind: input, shape index: {}]
  %s3 = inlined_call_operand.hbm [shape: bf16[64,2], index: 3, kind: input, shape index: {}]
  %s4 = inlined_call_operand.hbm [shape: f32[1,2], index: 4, kind: input, shape index: {}]
  %s5 = inlined_call_operand.hbm [shape: f32[1,64], index: 5, kind: input, shape index: {}]
  %s6 = inlined_call_operand.hbm [shape: f32[2,512], index: 6, kind: output, shape index: {0}]
  %s7 = inlined_call_operand.hbm [shape: bf16[512,64], index: 7, kind: output, shape index: {1}]
  %8 = xla_tuple %s6, %s7
  %s9 = sld [smem:[#allocation0]]
  $region66: #{tpu_custom_call.1} parent=0
    _
  %s11 = ssub.s32 1, %s9
  %s12 = scalar_select 0, %s11, %s9
  $region1: #{tpu_custom_call.1} parent=0
    #allocation2 [shape = 'u8[131072]{0}', space=vmem, size = 0x20000, scoped, tag = 'input window, operand 0, single buffered']
    #allocation3 [shape = 's32[1]{0}', space=sflag, size = 0x4, scoped, tag = 'scoped memory for tpu_custom_call.1']
    #allocation4 [shape = 's32[1]{0}', space=sflag, size = 0x4, scoped, tag = 'scoped memory for tpu_custom_call.1']
    #allocation5 [shape = 'u8[131072]{0}', space=vmem, size = 0x20000, scoped, tag = 'input window, operand 1, single buffered']
    #allocation6 [shape = 's32[1]{0}', space=sflag, size = 0x4, scoped, tag = 'scoped memory for tpu_custom_call.1']
    #allocation7 [shape = 'u8[262144]{0}', space=vmem, size = 0x40000, scoped, tag = 'input window, operand 2, single buffered']
    #allocation8 [shape = 'u8[16384]{0}', space=vmem, size = 0x4000, scoped, tag = 'input window, operand 3, single buffered']
    #allocation9 [shape = 's32[1]{0}', space=sflag, size = 0x4, scoped, tag = 'scoped memory for tpu_custom_call.1']
    #allocation10 [shape = 'u8[512]{0}', space=vmem, size = 0x400, scoped, tag = 'input window, operand 4, single buffered']
    #allocation11 [shape = 'u8[512]{0}', space=vmem, size = 0x400, scoped, tag = 'input window, operand 5, single buffered']
    #allocation12 [shape = 's32[1]{0}', space=sflag, size = 0x4, scoped, tag = 'scoped memory for tpu_custom_call.1']
    #allocation13 [shape = 'u8[4096]{0}', space=vmem, size = 0x1000, scoped, tag = 'output window, operand 0, single buffered']
    #allocation14 [shape = 'u8[131072]{0}', space=vmem, size = 0x20000, scoped, tag = 'output window, operand 1, single buffered']
    #allocation15 [shape = 's32[1]{0}', space=sflag, size = 0x4, scoped, tag = 'scoped memory for tpu_custom_call.1']
    %13 = vsyncpa [#allocation3], 0
    %14 = vsyncpa [#allocation6], 0
    %15 = vsyncpa [#allocation9], 0
    %16 = vsyncpa [#allocation12], 0
    %17 = vsyncpa [#allocation4], 0
    %18 = vsyncpa [#allocation15], 0
    // Predicated region
    $region2: #{tpu_custom_call.1} parent=1 // pred_check
      _
    $region3: #{tpu_custom_call.1} parent=1 // pred_check_branch
      %20 = sbr.rel (0) target = $region5
    $region4: #{tpu_custom_call.1} parent=1 // pred_region
      %s22 = ssub.s32 4096, 4096
      %23 = vsyncadd [#allocation3], %s22
      %s24 = sshll.u32 [#allocation2], 4
      %s25 = int_to_ptr.vmem [resolvable:$true] %s24
      %30 = dma.hbm_to_vmem [thread:$0]  %s0, 4096, %s25, [#allocation3], 64, 64, 4
    $region5: #{tpu_custom_call.1} parent=1 // pred_fallthru
      _
    // Predicated region
    $region6: #{tpu_custom_call.1} parent=1 // pred_check
      _
    $region7: #{tpu_custom_call.1} parent=1 // pred_check_branch
      %32 = sbr.rel (0) target = $region9
    $region8: #{tpu_custom_call.1} parent=1 // pred_region
      %s34 = ssub.s32 4096, 4096
      %35 = vsyncadd [#allocation6], %s34
      %s36 = sshll.u32 [#allocation5], 4
      %s37 = int_to_ptr.vmem [resolvable:$true] %s36
      %42 = dma.hbm_to_vmem [thread:$0]  %s1, 4096, %s37, [#allocation6], 64, 64, 4
    $region9: #{tpu_custom_call.1} parent=1 // pred_fallthru
      _
    // Predicated region
    $region10: #{tpu_custom_call.1} parent=1 // pred_check
      _
    $region11: #{tpu_custom_call.1} parent=1 // pred_check_branch
      %44 = sbr.rel (0) target = $region13
    $region12: #{tpu_custom_call.1} parent=1 // pred_region
      %s46 = ssub.s32 8192, 8192
      %47 = vsyncadd [#allocation6], %s46
      %s48 = sshll.u32 [#allocation7], 4
      %s49 = int_to_ptr.vmem [resolvable:$true] %s48
      %54 = dma.hbm_to_vmem [thread:$0]  %s2, 8192, %s49, [#allocation6], 128, 128, 8
    $region13: #{tpu_custom_call.1} parent=1 // pred_fallthru
      _
    // Predicated region
    $region14: #{tpu_custom_call.1} parent=1 // pred_check
      _
    $region15: #{tpu_custom_call.1} parent=1 // pred_check_branch
      %56 = sbr.rel (0) target = $region17
    $region16: #{tpu_custom_call.1} parent=1 // pred_region
      %s58 = ssub.s32 512, 512
      %59 = vsyncadd [#allocation9], %s58
      %s60 = sshll.u32 [#allocation8], 4
      %s61 = int_to_ptr.vmem [resolvable:$true] %s60
      %66 = dma.hbm_to_vmem [thread:$0]  %s3, 512, %s61, [#allocation9], 64, 64, 4
    $region17: #{tpu_custom_call.1} parent=1 // pred_fallthru
      _
    // Predicated region
    $region18: #{tpu_custom_call.1} parent=1 // pred_check
      _
    $region19: #{tpu_custom_call.1} parent=1 // pred_check_branch
      %68 = sbr.rel (0) target = $region21
    $region20: #{tpu_custom_call.1} parent=1 // pred_region
      %s70 = ssub.s32 16, 16
      %71 = vsyncadd [#allocation9], %s70
      %s73 = sshll.u32 [#allocation10], 4
      %s74 = int_to_ptr.vmem [resolvable:$true] %s73
      %76 = dma.hbm_to_vmem [thread:$0]  %s4, 16, %s74, [#allocation9]
    $region21: #{tpu_custom_call.1} parent=1 // pred_fallthru
      _
    // Predicated region
    $region22: #{tpu_custom_call.1} parent=1 // pred_check
      _
    $region23: #{tpu_custom_call.1} parent=1 // pred_check_branch
      %78 = sbr.rel (0) target = $region25
    $region24: #{tpu_custom_call.1} parent=1 // pred_region
      %s80 = ssub.s32 16, 16
      %81 = vsyncadd [#allocation12], %s80
      %s83 = sshll.u32 [#allocation11], 4
      %s84 = int_to_ptr.vmem [resolvable:$true] %s83
      %86 = dma.hbm_to_vmem [thread:$0]  %s5, 16, %s84, [#allocation12]
    $region25: #{tpu_custom_call.1} parent=1 // pred_fallthru
      _
    // Predicated region
    $region26: #{tpu_custom_call.1} parent=1 // pred_check
      _
    $region27: #{tpu_custom_call.1} parent=1 // pred_check_branch
      %88 = sbr.rel (0) target = $region29
    $region28: #{tpu_custom_call.1} parent=1 // pred_region
      %89 = dma.done [#allocation3], 4096
    $region29: #{tpu_custom_call.1} parent=1 // pred_fallthru
      _
    // Predicated region
    $region30: #{tpu_custom_call.1} parent=1 // pred_check
      _
    $region31: #{tpu_custom_call.1} parent=1 // pred_check_branch
      %91 = sbr.rel (0) target = $region33
    $region32: #{tpu_custom_call.1} parent=1 // pred_region
      %92 = dma.done [#allocation6], 4096
    $region33: #{tpu_custom_call.1} parent=1 // pred_fallthru
      _
    // Predicated region
    $region34: #{tpu_custom_call.1} parent=1 // pred_check
      _
    $region35: #{tpu_custom_call.1} parent=1 // pred_check_branch
      %94 = sbr.rel (0) target = $region37
    $region36: #{tpu_custom_call.1} parent=1 // pred_region
      %95 = dma.done [#allocation6], 8192
    $region37: #{tpu_custom_call.1} parent=1 // pred_fallthru
      _
    // Predicated region
    $region38: #{tpu_custom_call.1} parent=1 // pred_check
      _
    $region39: #{tpu_custom_call.1} parent=1 // pred_check_branch
      %97 = sbr.rel (0) target = $region41
    $region40: #{tpu_custom_call.1} parent=1 // pred_region
      %98 = dma.done [#allocation9], 512
    $region41: #{tpu_custom_call.1} parent=1 // pred_fallthru
      _
    // Predicated region
    $region42: #{tpu_custom_call.1} parent=1 // pred_check
      _
    $region43: #{tpu_custom_call.1} parent=1 // pred_check_branch
      %100 = sbr.rel (0) target = $region45
    $region44: #{tpu_custom_call.1} parent=1 // pred_region
      %101 = dma.done [#allocation9], 16
    $region45: #{tpu_custom_call.1} parent=1 // pred_fallthru
      _
    // Predicated region
    $region46: #{tpu_custom_call.1} parent=1 // pred_check
      _
    $region47: #{tpu_custom_call.1} parent=1 // pred_check_branch
      %103 = sbr.rel (0) target = $region49
    $region48: #{tpu_custom_call.1} parent=1 // pred_region
      %104 = dma.done [#allocation12], 16
    $region49: #{tpu_custom_call.1} parent=1 // pred_fallthru
      _
    %v106 = vld [vmem:[#allocation2] sm:$0xf]
    %v107 = vld [vmem:[#allocation2 + $0x4] sm:$0xf]
    %v108 = vld [vmem:[#allocation2 + $0x8] sm:$0xf]
    %v109 = vld [vmem:[#allocation2 + $0xc] sm:$0xf]
    %v110 = vld [vmem:[#allocation2 + $0x10] sm:$0xf]
    %v111 = vld [vmem:[#allocation2 + $0x14] sm:$0xf]
    %v112 = vld [vmem:[#allocation2 + $0x18] sm:$0xf]
    %v113 = vld [vmem:[#allocation2 + $0x1c] sm:$0xf]
    %v114 = vld [vmem:[#allocation2 + $0x20] sm:$0xf]
    %v115 = vld [vmem:[#allocation2 + $0x24] sm:$0xf]
    %v116 = vld [vmem:[#allocation2 + $0x28] sm:$0xf]
    %v117 = vld [vmem:[#allocation2 + $0x2c] sm:$0xf]
    %v118 = vld [vmem:[#allocation2 + $0x30] sm:$0xf]
    %v119 = vld [vmem:[#allocation2 + $0x34] sm:$0xf]
    %v120 = vld [vmem:[#allocation2 + $0x38] sm:$0xf]
    %v121 = vld [vmem:[#allocation2 + $0x3c] sm:$0xf]
    %v122 = vld [vmem:[#allocation2 + $0x40] sm:$0xf]
    %v123 = vld [vmem:[#allocation2 + $0x44] sm:$0xf]
    %v124 = vld [vmem:[#allocation2 + $0x48] sm:$0xf]
    %v125 = vld [vmem:[#allocation2 + $0x4c] sm:$0xf]
    %v126 = vld [vmem:[#allocation2 + $0x50] sm:$0xf]
    %v127 = vld [vmem:[#allocation2 + $0x54] sm:$0xf]
    %v128 = vld [vmem:[#allocation2 + $0x58] sm:$0xf]
    %v129 = vld [vmem:[#allocation2 + $0x5c] sm:$0xf]
    %v130 = vld [vmem:[#allocation2 + $0x60] sm:$0xf]
    %v131 = vld [vmem:[#allocation2 + $0x64] sm:$0xf]
    %v132 = vld [vmem:[#allocation2 + $0x68] sm:$0xf]
    %v133 = vld [vmem:[#allocation2 + $0x6c] sm:$0xf]
    %v134 = vld [vmem:[#allocation2 + $0x70] sm:$0xf]
    %v135 = vld [vmem:[#allocation2 + $0x74] sm:$0xf]
    %v136 = vld [vmem:[#allocation2 + $0x78] sm:$0xf]
    %v137 = vld [vmem:[#allocation2 + $0x7c] sm:$0xf]
    %v138 = vld [vmem:[#allocation2 + $0x80] sm:$0xf]
    %v139 = vld [vmem:[#allocation2 + $0x84] sm:$0xf]
    %v140 = vld [vmem:[#allocation2 + $0x88] sm:$0xf]
    %v141 = vld [vmem:[#allocation2 + $0x8c] sm:$0xf]
    %v142 = vld [vmem:[#allocation2 + $0x90] sm:$0xf]
    %v143 = vld [vmem:[#allocation2 + $0x94] sm:$0xf]
    %v144 = vld [vmem:[#allocation2 + $0x98] sm:$0xf]
    %v145 = vld [vmem:[#allocation2 + $0x9c] sm:$0xf]
    %v146 = vld [vmem:[#allocation2 + $0xa0] sm:$0xf]
    %v147 = vld [vmem:[#allocation2 + $0xa4] sm:$0xf]
    %v148 = vld [vmem:[#allocation2 + $0xa8] sm:$0xf]
    %v149 = vld [vmem:[#allocation2 + $0xac] sm:$0xf]
    %v150 = vld [vmem:[#allocation2 + $0xb0] sm:$0xf]
    %v151 = vld [vmem:[#allocation2 + $0xb4] sm:$0xf]
    %v152 = vld [vmem:[#allocation2 + $0xb8] sm:$0xf]
    %v153 = vld [vmem:[#allocation2 + $0xbc] sm:$0xf]
    %v154 = vld [vmem:[#allocation2 + $0xc0] sm:$0xf]
    %v155 = vld [vmem:[#allocation2 + $0xc4] sm:$0xf]
    %v156 = vld [vmem:[#allocation2 + $0xc8] sm:$0xf]
    %v157 = vld [vmem:[#allocation2 + $0xcc] sm:$0xf]
    %v158 = vld [vmem:[#allocation2 + $0xd0] sm:$0xf]
    %v159 = vld [vmem:[#allocation2 + $0xd4] sm:$0xf]
    %v160 = vld [vmem:[#allocation2 + $0xd8] sm:$0xf]
    %v161 = vld [vmem:[#allocation2 + $0xdc] sm:$0xf]
    %v162 = vld [vmem:[#allocation2 + $0xe0] sm:$0xf]
    %v163 = vld [vmem:[#allocation2 + $0xe4] sm:$0xf]
    %v164 = vld [vmem:[#allocation2 + $0xe8] sm:$0xf]
    %v165 = vld [vmem:[#allocation2 + $0xec] sm:$0xf]
    %v166 = vld [vmem:[#allocation2 + $0xf0] sm:$0xf]
    %v167 = vld [vmem:[#allocation2 + $0xf4] sm:$0xf]
    %v168 = vld [vmem:[#allocation2 + $0xf8] sm:$0xf]
    %v169 = vld [vmem:[#allocation2 + $0xfc] sm:$0xf]
    %v170 = vld [vmem:[#allocation7] sm:$0xff]
    %v171 = vld [vmem:[#allocation7 + $0x8] sm:$0xff]
    %v172 = vld [vmem:[#allocation7 + $0x10] sm:$0xff]
    %v173 = vld [vmem:[#allocation7 + $0x18] sm:$0xff]
    %v174 = vld [vmem:[#allocation7 + $0x20] sm:$0xff]
    %v175 = vld [vmem:[#allocation7 + $0x28] sm:$0xff]
    %v176 = vld [vmem:[#allocation7 + $0x30] sm:$0xff]
    %v177 = vld [vmem:[#allocation7 + $0x38] sm:$0xff]
    %v178 = vld [vmem:[#allocation7 + $0x40] sm:$0xff]
    %v179 = vld [vmem:[#allocation7 + $0x48] sm:$0xff]
    %v180 = vld [vmem:[#allocation7 + $0x50] sm:$0xff]
    %v181 = vld [vmem:[#allocation7 + $0x58] sm:$0xff]
    %v182 = vld [vmem:[#allocation7 + $0x60] sm:$0xff]
    %v183 = vld [vmem:[#allocation7 + $0x68] sm:$0xff]
    %v184 = vld [vmem:[#allocation7 + $0x70] sm:$0xff]
    %v185 = vld [vmem:[#allocation7 + $0x78] sm:$0xff]
    %v186 = vld [vmem:[#allocation7 + $0x80] sm:$0xff]
    %v187 = vld [vmem:[#allocation7 + $0x88] sm:$0xff]
    %v188 = vld [vmem:[#allocation7 + $0x90] sm:$0xff]
    %v189 = vld [vmem:[#allocation7 + $0x98] sm:$0xff]
    %v190 = vld [vmem:[#allocation7 + $0xa0] sm:$0xff]
    %v191 = vld [vmem:[#allocation7 + $0xa8] sm:$0xff]
    %v192 = vld [vmem:[#allocation7 + $0xb0] sm:$0xff]
    %v193 = vld [vmem:[#allocation7 + $0xb8] sm:$0xff]
    %v194 = vld [vmem:[#allocation7 + $0xc0] sm:$0xff]
    %v195 = vld [vmem:[#allocation7 + $0xc8] sm:$0xff]
    %v196 = vld [vmem:[#allocation7 + $0xd0] sm:$0xff]
    %v197 = vld [vmem:[#allocation7 + $0xd8] sm:$0xff]
    %v198 = vld [vmem:[#allocation7 + $0xe0] sm:$0xff]
    %v199 = vld [vmem:[#allocation7 + $0xe8] sm:$0xff]
    %v200 = vld [vmem:[#allocation7 + $0xf0] sm:$0xff]
    %v201 = vld [vmem:[#allocation7 + $0xf8] sm:$0xff]
    %v202 = vld [vmem:[#allocation7 + $0x100] sm:$0xff]
    %v203 = vld [vmem:[#allocation7 + $0x108] sm:$0xff]
    %v204 = vld [vmem:[#allocation7 + $0x110] sm:$0xff]
    %v205 = vld [vmem:[#allocation7 + $0x118] sm:$0xff]
    %v206 = vld [vmem:[#allocation7 + $0x120] sm:$0xff]
    %v207 = vld [vmem:[#allocation7 + $0x128] sm:$0xff]
    %v208 = vld [vmem:[#allocation7 + $0x130] sm:$0xff]
    %v209 = vld [vmem:[#allocation7 + $0x138] sm:$0xff]
    %v210 = vld [vmem:[#allocation7 + $0x140] sm:$0xff]
    %v211 = vld [vmem:[#allocation7 + $0x148] sm:$0xff]
    %v212 = vld [vmem:[#allocation7 + $0x150] sm:$0xff]
    %v213 = vld [vmem:[#allocation7 + $0x158] sm:$0xff]
    %v214 = vld [vmem:[#allocation7 + $0x160] sm:$0xff]
    %v215 = vld [vmem:[#allocation7 + $0x168] sm:$0xff]
    %v216 = vld [vmem:[#allocation7 + $0x170] sm:$0xff]
    %v217 = vld [vmem:[#allocation7 + $0x178] sm:$0xff]
    %v218 = vld [vmem:[#allocation7 + $0x180] sm:$0xff]
    %v219 = vld [vmem:[#allocation7 + $0x188] sm:$0xff]
    %v220 = vld [vmem:[#allocation7 + $0x190] sm:$0xff]
    %v221 = vld [vmem:[#allocation7 + $0x198] sm:$0xff]
    %v222 = vld [vmem:[#allocation7 + $0x1a0] sm:$0xff]
    %v223 = vld [vmem:[#allocation7 + $0x1a8] sm:$0xff]
    %v224 = vld [vmem:[#allocation7 + $0x1b0] sm:$0xff]
    %v225 = vld [vmem:[#allocation7 + $0x1b8] sm:$0xff]
    %v226 = vld [vmem:[#allocation7 + $0x1c0] sm:$0xff]
    %v227 = vld [vmem:[#allocation7 + $0x1c8] sm:$0xff]
    %v228 = vld [vmem:[#allocation7 + $0x1d0] sm:$0xff]
    %v229 = vld [vmem:[#allocation7 + $0x1d8] sm:$0xff]
    %v230 = vld [vmem:[#allocation7 + $0x1e0] sm:$0xff]
    %v231 = vld [vmem:[#allocation7 + $0x1e8] sm:$0xff]
    %v232 = vld [vmem:[#allocation7 + $0x1f0] sm:$0xff]
    %v233 = vld [vmem:[#allocation7 + $0x1f8] sm:$0xff]
    %v234 = vld [vmem:[#allocation8] sm:$0xf]
    %v235 = vld [vmem:[#allocation8 + $0x4] sm:$0xf]
    %v236 = vld [vmem:[#allocation8 + $0x8] sm:$0xf]
    %v237 = vld [vmem:[#allocation8 + $0xc] sm:$0xf]
    %v238 = vld [vmem:[#allocation8 + $0x10] sm:$0xf]
    %v239 = vld [vmem:[#allocation8 + $0x14] sm:$0xf]
    %v240 = vld [vmem:[#allocation8 + $0x18] sm:$0xf]
    %v241 = vld [vmem:[#allocation8 + $0x1c] sm:$0xf]
    %v242 = vld [vmem:[#allocation10] sm:$0x1]
    %v244 = vlaneseq
    %v245 = vshrl.u32 %v244, 7
    %v246 = vsub.s32 0, %v245
    %v247 = vrot.slane %v242, %v246
    %v313 = vunpack.c.l.b16 %v106
    %v314 = vunpack.c.l.b16 %v107
    %v315 = vunpack.c.l.b16 %v108
    %v316 = vunpack.c.l.b16 %v109
    %v317 = vunpack.c.l.b16 %v110
    %v318 = vunpack.c.l.b16 %v111
    %v319 = vunpack.c.l.b16 %v112
    %v320 = vunpack.c.l.b16 %v113
    %v321 = vunpack.c.l.b16 %v114
    %v322 = vunpack.c.l.b16 %v115
    %v323 = vunpack.c.l.b16 %v116
    %v324 = vunpack.c.l.b16 %v117
    %v325 = vunpack.c.l.b16 %v118
    %v326 = vunpack.c.l.b16 %v119
    %v327 = vunpack.c.l.b16 %v120
    %v328 = vunpack.c.l.b16 %v121
    %v329 = vunpack.c.l.b16 %v122
    %v330 = vunpack.c.l.b16 %v123
    %v331 = vunpack.c.l.b16 %v124
    %v332 = vunpack.c.l.b16 %v125
    %v333 = vunpack.c.l.b16 %v126
    %v334 = vunpack.c.l.b16 %v127
    %v335 = vunpack.c.l.b16 %v128
    %v336 = vunpack.c.l.b16 %v129
    %v337 = vunpack.c.l.b16 %v130
    %v338 = vunpack.c.l.b16 %v131
    %v339 = vunpack.c.l.b16 %v132
    %v340 = vunpack.c.l.b16 %v133
    %v341 = vunpack.c.l.b16 %v134
    %v342 = vunpack.c.l.b16 %v135
    %v343 = vunpack.c.l.b16 %v136
    %v344 = vunpack.c.l.b16 %v137
    %v345 = vunpack.c.l.b16 %v138
    %v346 = vunpack.c.l.b16 %v139
    %v347 = vunpack.c.l.b16 %v140
    %v348 = vunpack.c.l.b16 %v141
    %v349 = vunpack.c.l.b16 %v142
    %v350 = vunpack.c.l.b16 %v143
    %v351 = vunpack.c.l.b16 %v144
    %v352 = vunpack.c.l.b16 %v145
    %v353 = vunpack.c.l.b16 %v146
    %v354 = vunpack.c.l.b16 %v147
    %v355 = vunpack.c.l.b16 %v148
    %v356 = vunpack.c.l.b16 %v149
    %v357 = vunpack.c.l.b16 %v150
    %v358 = vunpack.c.l.b16 %v151
    %v359 = vunpack.c.l.b16 %v152
    %v360 = vunpack.c.l.b16 %v153
    %v361 = vunpack.c.l.b16 %v154
    %v362 = vunpack.c.l.b16 %v155
    %v363 = vunpack.c.l.b16 %v156
    %v364 = vunpack.c.l.b16 %v157
    %v365 = vunpack.c.l.b16 %v158
    %v366 = vunpack.c.l.b16 %v159
    %v367 = vunpack.c.l.b16 %v160
    %v368 = vunpack.c.l.b16 %v161
    %v369 = vunpack.c.l.b16 %v162
    %v370 = vunpack.c.l.b16 %v163
    %v371 = vunpack.c.l.b16 %v164
    %v372 = vunpack.c.l.b16 %v165
    %v373 = vunpack.c.l.b16 %v166
    %v374 = vunpack.c.l.b16 %v167
    %v375 = vunpack.c.l.b16 %v168
    %v376 = vunpack.c.l.b16 %v169
    %v377 = vpack.c.b16 %v314, %v313
    %v378 = vpack.c.b16 %v316, %v315
    %v379 = vpack.c.b16 %v318, %v317
    %v380 = vpack.c.b16 %v320, %v319
    %v381 = vpack.c.b16 %v322, %v321
    %v382 = vpack.c.b16 %v324, %v323
    %v383 = vpack.c.b16 %v326, %v325
    %v384 = vpack.c.b16 %v328, %v327
    %v385 = vpack.c.b16 %v330, %v329
    %v386 = vpack.c.b16 %v332, %v331
    %v387 = vpack.c.b16 %v334, %v333
    %v388 = vpack.c.b16 %v336, %v335
    %v389 = vpack.c.b16 %v338, %v337
    %v390 = vpack.c.b16 %v340, %v339
    %v391 = vpack.c.b16 %v342, %v341
    %v392 = vpack.c.b16 %v344, %v343
    %v393 = vpack.c.b16 %v346, %v345
    %v394 = vpack.c.b16 %v348, %v347
    %v395 = vpack.c.b16 %v350, %v349
    %v396 = vpack.c.b16 %v352, %v351
    %v397 = vpack.c.b16 %v354, %v353
    %v398 = vpack.c.b16 %v356, %v355
    %v399 = vpack.c.b16 %v358, %v357
    %v400 = vpack.c.b16 %v360, %v359
    %v401 = vpack.c.b16 %v362, %v361
    %v402 = vpack.c.b16 %v364, %v363
    %v403 = vpack.c.b16 %v366, %v365
    %v404 = vpack.c.b16 %v368, %v367
    %v405 = vpack.c.b16 %v370, %v369
    %v406 = vpack.c.b16 %v372, %v371
    %v407 = vpack.c.b16 %v374, %v373
    %v408 = vpack.c.b16 %v376, %v375
    %v417 = vunpack.c.l.b16 %v234
    %v418 = vunpack.c.l.b16 %v235
    %v419 = vunpack.c.l.b16 %v236
    %v420 = vunpack.c.l.b16 %v237
    %v421 = vunpack.c.l.b16 %v238
    %v422 = vunpack.c.l.b16 %v239
    %v423 = vunpack.c.l.b16 %v240
    %v424 = vunpack.c.l.b16 %v241
    %v425 = vpack.c.b16 %v418, %v417
    %v426 = vpack.c.b16 %v420, %v419
    %v427 = vpack.c.b16 %v422, %v421
    %v428 = vpack.c.b16 %v424, %v423
    %vm433 = vcmask 523264
    %v435 = vsel %vm433, %v377, 0
    %v438 = vsel %vm433, %v378, 0
    %v441 = vsel %vm433, %v379, 0
    %v444 = vsel %vm433, %v380, 0
    %v447 = vsel %vm433, %v381, 0
    %v450 = vsel %vm433, %v382, 0
    %v453 = vsel %vm433, %v383, 0
    %v456 = vsel %vm433, %v384, 0
    %v459 = vsel %vm433, %v385, 0
    %v462 = vsel %vm433, %v386, 0
    %v465 = vsel %vm433, %v387, 0
    %v468 = vsel %vm433, %v388, 0
    %v471 = vsel %vm433, %v389, 0
    %v474 = vsel %vm433, %v390, 0
    %v477 = vsel %vm433, %v391, 0
    %v480 = vsel %vm433, %v392, 0
    %v483 = vsel %vm433, %v393, 0
    %v486 = vsel %vm433, %v394, 0
    %v489 = vsel %vm433, %v395, 0
    %v492 = vsel %vm433, %v396, 0
    %v495 = vsel %vm433, %v397, 0
    %v498 = vsel %vm433, %v398, 0
    %v501 = vsel %vm433, %v399, 0
    %v504 = vsel %vm433, %v400, 0
    %v507 = vsel %vm433, %v401, 0
    %v510 = vsel %vm433, %v402, 0
    %v513 = vsel %vm433, %v403, 0
    %v516 = vsel %vm433, %v404, 0
    %v519 = vsel %vm433, %v405, 0
    %v522 = vsel %vm433, %v406, 0
    %v525 = vsel %vm433, %v407, 0
    %v528 = vsel %vm433, %v408, 0
    %530 = vmatprep.subr.bf16.mxu0 0
    %531 = vmatpush1.bf16.msra.mxu0 %v425
    %532 = vmatprep.subr.bf16.mxu0 0
    %533 = vmatpush1.bf16.msra.mxu0 %v426
    %534 = vmatprep.subr.bf16.mxu0 0
    %535 = vmatpush1.bf16.msra.mxu0 %v427
    %536 = vmatprep.subr.bf16.mxu0 0
    %537 = vmatpush1.bf16.msra.mxu0 %v428
    %538 = vmatprep.subr.bf16.mxu0 0
    %539 = vmatpush1.bf16.msra.mxu0 0
    %540 = vmatprep.subr.bf16.mxu0 0
    %541 = vmatpush1.bf16.msra.mxu0 0
    %542 = vmatprep.subr.bf16.mxu0 0
    %543 = vmatpush1.bf16.msra.mxu0 0
    %544 = vmatprep.subr.bf16.mxu0 0
    %545 = vmatpush1.bf16.msra.mxu0 0
    %546 = vmatprep.subr.bf16.mxu0 0
    %547 = vmatpush1.bf16.msra.mxu0 0
    %548 = vmatprep.subr.bf16.mxu0 0
    %549 = vmatpush1.bf16.msra.mxu0 0
    %550 = vmatprep.subr.bf16.mxu0 0
    %551 = vmatpush1.bf16.msra.mxu0 0
    %552 = vmatprep.subr.bf16.mxu0 0
    %553 = vmatpush1.bf16.msra.mxu0 0
    %554 = vmatprep.subr.bf16.mxu0 0
    %555 = vmatpush1.bf16.msra.mxu0 0
    %556 = vmatprep.subr.bf16.mxu0 0
    %557 = vmatpush1.bf16.msra.mxu0 0
    %558 = vmatprep.subr.bf16.mxu0 0
    %559 = vmatpush1.bf16.msra.mxu0 0
    %560 = vmatprep.subr.bf16.mxu0 0
    %561 = vmatpush1.bf16.msra.mxu0 0
    %562 = vmatprep.mubr.bf16.mxu0 0
    %563 = vmatmul.mubr.bf16.gmra.mrb[0].mxu0 %v435
    %v564 = vpop.f32.mrb[0].mxu0
    %v565 = vadd.f32 %v247, %v564
    %v566 = vpop.f32.mrb[0].mxu0
    %v567 = vpop.f32.mrb[0].mxu0
    %v568 = vadd.f32 %v247, %v567
    %v569 = vpop.f32.mrb[0].mxu0
    %570 = vmatprep.mubr.bf16.mxu0 0
    %571 = vmatmul.mubr.bf16.gmra.mrb[0].mxu0 %v438
    %v572 = vpop.f32.mrb[0].mxu0
    %v573 = vadd.f32 %v247, %v572
    %v574 = vpop.f32.mrb[0].mxu0
    %v575 = vpop.f32.mrb[0].mxu0
    %v576 = vadd.f32 %v247, %v575
    %v577 = vpop.f32.mrb[0].mxu0
    %578 = vmatprep.mubr.bf16.mxu0 0
    %579 = vmatmul.mubr.bf16.gmra.mrb[0].mxu0 %v441
    %v580 = vpop.f32.mrb[0].mxu0
    %v581 = vadd.f32 %v247, %v580
    %v582 = vpop.f32.mrb[0].mxu0
    %v583 = vpop.f32.mrb[0].mxu0
    %v584 = vadd.f32 %v247, %v583
    %v585 = vpop.f32.mrb[0].mxu0
    %586 = vmatprep.mubr.bf16.mxu0 0
    %587 = vmatmul.mubr.bf16.gmra.mrb[0].mxu0 %v444
    %v588 = vpop.f32.mrb[0].mxu0
    %v589 = vadd.f32 %v247, %v588
    %v590 = vpop.f32.mrb[0].mxu0
    %v591 = vpop.f32.mrb[0].mxu0
    %v592 = vadd.f32 %v247, %v591
    %v593 = vpop.f32.mrb[0].mxu0
    %594 = vmatprep.mubr.bf16.mxu0 0
    %595 = vmatmul.mubr.bf16.gmra.mrb[0].mxu0 %v447
    %v596 = vpop.f32.mrb[0].mxu0
    %v597 = vadd.f32 %v247, %v596
    %v598 = vpop.f32.mrb[0].mxu0
    %v599 = vpop.f32.mrb[0].mxu0
    %v600 = vadd.f32 %v247, %v599
    %v601 = vpop.f32.mrb[0].mxu0
    %602 = vmatprep.mubr.bf16.mxu0 0
    %603 = vmatmul.mubr.bf16.gmra.mrb[0].mxu0 %v450
    %v604 = vpop.f32.mrb[0].mxu0
    %v605 = vadd.f32 %v247, %v604
    %v606 = vpop.f32.mrb[0].mxu0
    %v607 = vpop.f32.mrb[0].mxu0
    %v608 = vadd.f32 %v247, %v607
    %v609 = vpop.f32.mrb[0].mxu0
    %610 = vmatprep.mubr.bf16.mxu0 0
    %611 = vmatmul.mubr.bf16.gmra.mrb[0].mxu0 %v453
    %v612 = vpop.f32.mrb[0].mxu0
    %v613 = vadd.f32 %v247, %v612
    %v614 = vpop.f32.mrb[0].mxu0
    %v615 = vpop.f32.mrb[0].mxu0
    %v616 = vadd.f32 %v247, %v615
    %v617 = vpop.f32.mrb[0].mxu0
    %618 = vmatprep.mubr.bf16.mxu0 0
    %619 = vmatmul.mubr.bf16.gmra.mrb[0].mxu0 %v456
    %v620 = vpop.f32.mrb[0].mxu0
    %v621 = vadd.f32 %v247, %v620
    %v622 = vpop.f32.mrb[0].mxu0
    %v623 = vpop.f32.mrb[0].mxu0
    %v624 = vadd.f32 %v247, %v623
    %v625 = vpop.f32.mrb[0].mxu0
    %626 = vmatprep.mubr.bf16.mxu0 0
    %627 = vmatmul.mubr.bf16.gmra.mrb[0].mxu0 %v459
    %v628 = vpop.f32.mrb[0].mxu0
    %v629 = vadd.f32 %v247, %v628
    %v630 = vpop.f32.mrb[0].mxu0
    %v631 = vpop.f32.mrb[0].mxu0
    %v632 = vadd.f32 %v247, %v631
    %v633 = vpop.f32.mrb[0].mxu0
    %634 = vmatprep.mubr.bf16.mxu0 0
    %635 = vmatmul.mubr.bf16.gmra.mrb[0].mxu0 %v462
    %v636 = vpop.f32.mrb[0].mxu0
    %v637 = vadd.f32 %v247, %v636
    %v638 = vpop.f32.mrb[0].mxu0
    %v639 = vpop.f32.mrb[0].mxu0
    %v640 = vadd.f32 %v247, %v639
    %v641 = vpop.f32.mrb[0].mxu0
    %642 = vmatprep.mubr.bf16.mxu0 0
    %643 = vmatmul.mubr.bf16.gmra.mrb[0].mxu0 %v465
    %v644 = vpop.f32.mrb[0].mxu0
    %v645 = vadd.f32 %v247, %v644
    %v646 = vpop.f32.mrb[0].mxu0
    %v647 = vpop.f32.mrb[0].mxu0
    %v648 = vadd.f32 %v247, %v647
    %v649 = vpop.f32.mrb[0].mxu0
    %650 = vmatprep.mubr.bf16.mxu0 0
    %651 = vmatmul.mubr.bf16.gmra.mrb[0].mxu0 %v468
    %v652 = vpop.f32.mrb[0].mxu0
    %v653 = vadd.f32 %v247, %v652
    %v654 = vpop.f32.mrb[0].mxu0
    %v655 = vpop.f32.mrb[0].mxu0
    %v656 = vadd.f32 %v247, %v655
    %v657 = vpop.f32.mrb[0].mxu0
    %658 = vmatprep.mubr.bf16.mxu0 0
    %659 = vmatmul.mubr.bf16.gmra.mrb[0].mxu0 %v471
    %v660 = vpop.f32.mrb[0].mxu0
    %v661 = vadd.f32 %v247, %v660
    %v662 = vpop.f32.mrb[0].mxu0
    %v663 = vpop.f32.mrb[0].mxu0
    %v664 = vadd.f32 %v247, %v663
    %v665 = vpop.f32.mrb[0].mxu0
    %666 = vmatprep.mubr.bf16.mxu0 0
    %667 = vmatmul.mubr.bf16.gmra.mrb[0].mxu0 %v474
    %v668 = vpop.f32.mrb[0].mxu0
    %v669 = vadd.f32 %v247, %v668
    %v670 = vpop.f32.mrb[0].mxu0
    %v671 = vpop.f32.mrb[0].mxu0
    %v672 = vadd.f32 %v247, %v671
    %v673 = vpop.f32.mrb[0].mxu0
    %674 = vmatprep.mubr.bf16.mxu0 0
    %675 = vmatmul.mubr.bf16.gmra.mrb[0].mxu0 %v477
    %v676 = vpop.f32.mrb[0].mxu0
    %v677 = vadd.f32 %v247, %v676
    %v678 = vpop.f32.mrb[0].mxu0
    %v679 = vpop.f32.mrb[0].mxu0
    %v680 = vadd.f32 %v247, %v679
    %v681 = vpop.f32.mrb[0].mxu0
    %682 = vmatprep.mubr.bf16.mxu0 0
    %683 = vmatmul.mubr.bf16.gmra.mrb[0].mxu0 %v480
    %v684 = vpop.f32.mrb[0].mxu0
    %v685 = vadd.f32 %v247, %v684
    %v686 = vpop.f32.mrb[0].mxu0
    %v687 = vpop.f32.mrb[0].mxu0
    %v688 = vadd.f32 %v247, %v687
    %v689 = vpop.f32.mrb[0].mxu0
    %690 = vmatprep.mubr.bf16.mxu0 0
    %691 = vmatmul.mubr.bf16.gmra.mrb[0].mxu0 %v483
    %v692 = vpop.f32.mrb[0].mxu0
    %v693 = vadd.f32 %v247, %v692
    %v694 = vpop.f32.mrb[0].mxu0
    %v695 = vpop.f32.mrb[0].mxu0
    %v696 = vadd.f32 %v247, %v695
    %v697 = vpop.f32.mrb[0].mxu0
    %698 = vmatprep.mubr.bf16.mxu0 0
    %699 = vmatmul.mubr.bf16.gmra.mrb[0].mxu0 %v486
    %v700 = vpop.f32.mrb[0].mxu0
    %v701 = vadd.f32 %v247, %v700
    %v702 = vpop.f32.mrb[0].mxu0
    %v703 = vpop.f32.mrb[0].mxu0
    %v704 = vadd.f32 %v247, %v703
    %v705 = vpop.f32.mrb[0].mxu0
    %706 = vmatprep.mubr.bf16.mxu0 0
    %707 = vmatmul.mubr.bf16.gmra.mrb[0].mxu0 %v489
    %v708 = vpop.f32.mrb[0].mxu0
    %v709 = vadd.f32 %v247, %v708
    %v710 = vpop.f32.mrb[0].mxu0
    %v711 = vpop.f32.mrb[0].mxu0
    %v712 = vadd.f32 %v247, %v711
    %v713 = vpop.f32.mrb[0].mxu0
    %714 = vmatprep.mubr.bf16.mxu0 0
    %715 = vmatmul.mubr.bf16.gmra.mrb[0].mxu0 %v492
    %v716 = vpop.f32.mrb[0].mxu0
    %v717 = vadd.f32 %v247, %v716
    %v718 = vpop.f32.mrb[0].mxu0
    %v719 = vpop.f32.mrb[0].mxu0
    %v720 = vadd.f32 %v247, %v719
    %v721 = vpop.f32.mrb[0].mxu0
    %722 = vmatprep.mubr.bf16.mxu0 0
    %723 = vmatmul.mubr.bf16.gmra.mrb[0].mxu0 %v495
    %v724 = vpop.f32.mrb[0].mxu0
    %v725 = vadd.f32 %v247, %v724
    %v726 = vpop.f32.mrb[0].mxu0
    %v727 = vpop.f32.mrb[0].mxu0
    %v728 = vadd.f32 %v247, %v727
    %v729 = vpop.f32.mrb[0].mxu0
    %730 = vmatprep.mubr.bf16.mxu0 0
    %731 = vmatmul.mubr.bf16.gmra.mrb[0].mxu0 %v498
    %v732 = vpop.f32.mrb[0].mxu0
    %v733 = vadd.f32 %v247, %v732
    %v734 = vpop.f32.mrb[0].mxu0
    %v735 = vpop.f32.mrb[0].mxu0
    %v736 = vadd.f32 %v247, %v735
    %v737 = vpop.f32.mrb[0].mxu0
    %738 = vmatprep.mubr.bf16.mxu0 0
    %739 = vmatmul.mubr.bf16.gmra.mrb[0].mxu0 %v501
    %v740 = vpop.f32.mrb[0].mxu0
    %v741 = vadd.f32 %v247, %v740
    %v742 = vpop.f32.mrb[0].mxu0
    %v743 = vpop.f32.mrb[0].mxu0
    %v744 = vadd.f32 %v247, %v743
    %v745 = vpop.f32.mrb[0].mxu0
    %746 = vmatprep.mubr.bf16.mxu0 0
    %747 = vmatmul.mubr.bf16.gmra.mrb[0].mxu0 %v504
    %v748 = vpop.f32.mrb[0].mxu0
    %v749 = vadd.f32 %v247, %v748
    %v750 = vpop.f32.mrb[0].mxu0
    %v751 = vpop.f32.mrb[0].mxu0
    %v752 = vadd.f32 %v247, %v751
    %v753 = vpop.f32.mrb[0].mxu0
    %754 = vmatprep.mubr.bf16.mxu0 0
    %755 = vmatmul.mubr.bf16.gmra.mrb[0].mxu0 %v507
    %v756 = vpop.f32.mrb[0].mxu0
    %v757 = vadd.f32 %v247, %v756
    %v758 = vpop.f32.mrb[0].mxu0
    %v759 = vpop.f32.mrb[0].mxu0
    %v760 = vadd.f32 %v247, %v759
    %v761 = vpop.f32.mrb[0].mxu0
    %762 = vmatprep.mubr.bf16.mxu0 0
    %763 = vmatmul.mubr.bf16.gmra.mrb[0].mxu0 %v510
    %v764 = vpop.f32.mrb[0].mxu0
    %v765 = vadd.f32 %v247, %v764
    %v766 = vpop.f32.mrb[0].mxu0
    %v767 = vpop.f32.mrb[0].mxu0
    %v768 = vadd.f32 %v247, %v767
    %v769 = vpop.f32.mrb[0].mxu0
    %770 = vmatprep.mubr.bf16.mxu0 0
    %771 = vmatmul.mubr.bf16.gmra.mrb[0].mxu0 %v513
    %v772 = vpop.f32.mrb[0].mxu0
    %v773 = vadd.f32 %v247, %v772
    %v774 = vpop.f32.mrb[0].mxu0
    %v775 = vpop.f32.mrb[0].mxu0
    %v776 = vadd.f32 %v247, %v775
    %v777 = vpop.f32.mrb[0].mxu0
    %778 = vmatprep.mubr.bf16.mxu0 0
    %779 = vmatmul.mubr.bf16.gmra.mrb[0].mxu0 %v516
    %v780 = vpop.f32.mrb[0].mxu0
    %v781 = vadd.f32 %v247, %v780
    %v782 = vpop.f32.mrb[0].mxu0
    %v783 = vpop.f32.mrb[0].mxu0
    %v784 = vadd.f32 %v247, %v783
    %v785 = vpop.f32.mrb[0].mxu0
    %786 = vmatprep.mubr.bf16.mxu0 0
    %787 = vmatmul.mubr.bf16.gmra.mrb[0].mxu0 %v519
    %v788 = vpop.f32.mrb[0].mxu0
    %v789 = vadd.f32 %v247, %v788
    %v790 = vpop.f32.mrb[0].mxu0
    %v791 = vpop.f32.mrb[0].mxu0
    %v792 = vadd.f32 %v247, %v791
    %v793 = vpop.f32.mrb[0].mxu0
    %794 = vmatprep.mubr.bf16.mxu0 0
    %795 = vmatmul.mubr.bf16.gmra.mrb[0].mxu0 %v522
    %v796 = vpop.f32.mrb[0].mxu0
    %v797 = vadd.f32 %v247, %v796
    %v798 = vpop.f32.mrb[0].mxu0
    %v799 = vpop.f32.mrb[0].mxu0
    %v800 = vadd.f32 %v247, %v799
    %v801 = vpop.f32.mrb[0].mxu0
    %802 = vmatprep.mubr.bf16.mxu0 0
    %803 = vmatmul.mubr.bf16.gmra.mrb[0].mxu0 %v525
    %v804 = vpop.f32.mrb[0].mxu0
    %v805 = vadd.f32 %v247, %v804
    %v806 = vpop.f32.mrb[0].mxu0
    %v807 = vpop.f32.mrb[0].mxu0
    %v808 = vadd.f32 %v247, %v807
    %v809 = vpop.f32.mrb[0].mxu0
    %810 = vmatprep.mubr.bf16.mxu0 0
    %811 = vmatmul.mubr.bf16.gmra.mrb[0].mxu0 %v528
    %v812 = vpop.f32.mrb[0].mxu0
    %v813 = vadd.f32 %v247, %v812
    %v814 = vpop.f32.mrb[0].mxu0
    %v815 = vpop.f32.mrb[0].mxu0
    %v816 = vadd.f32 %v247, %v815
    %v817 = vpop.f32.mrb[0].mxu0
    %818 = vdwg.mxu0
    %v819 = vsub.f32 1.0, %v170
    %v820 = vsub.f32 1.0, %v171
    %v821 = vsub.f32 1.0, %v172
    %v822 = vsub.f32 1.0, %v173
    %v823 = vsub.f32 1.0, %v174
    %v824 = vsub.f32 1.0, %v175
    %v825 = vsub.f32 1.0, %v176
    %v826 = vsub.f32 1.0, %v177
    %v827 = vsub.f32 1.0, %v178
    %v828 = vsub.f32 1.0, %v179
    %v829 = vsub.f32 1.0, %v180
    %v830 = vsub.f32 1.0, %v181
    %v831 = vsub.f32 1.0, %v182
    %v832 = vsub.f32 1.0, %v183
    %v833 = vsub.f32 1.0, %v184
    %v834 = vsub.f32 1.0, %v185
    %v835 = vsub.f32 1.0, %v186
    %v836 = vsub.f32 1.0, %v187
    %v837 = vsub.f32 1.0, %v188
    %v838 = vsub.f32 1.0, %v189
    %v839 = vsub.f32 1.0, %v190
    %v840 = vsub.f32 1.0, %v191
    %v841 = vsub.f32 1.0, %v192
    %v842 = vsub.f32 1.0, %v193
    %v843 = vsub.f32 1.0, %v194
    %v844 = vsub.f32 1.0, %v195
    %v845 = vsub.f32 1.0, %v196
    %v846 = vsub.f32 1.0, %v197
    %v847 = vsub.f32 1.0, %v198
    %v848 = vsub.f32 1.0, %v199
    %v849 = vsub.f32 1.0, %v200
    %v850 = vsub.f32 1.0, %v201
    %v851 = vsub.f32 1.0, %v202
    %v852 = vsub.f32 1.0, %v203
    %v853 = vsub.f32 1.0, %v204
    %v854 = vsub.f32 1.0, %v205
    %v855 = vsub.f32 1.0, %v206
    %v856 = vsub.f32 1.0, %v207
    %v857 = vsub.f32 1.0, %v208
    %v858 = vsub.f32 1.0, %v209
    %v859 = vsub.f32 1.0, %v210
    %v860 = vsub.f32 1.0, %v211
    %v861 = vsub.f32 1.0, %v212
    %v862 = vsub.f32 1.0, %v213
    %v863 = vsub.f32 1.0, %v214
    %v864 = vsub.f32 1.0, %v215
    %v865 = vsub.f32 1.0, %v216
    %v866 = vsub.f32 1.0, %v217
    %v867 = vsub.f32 1.0, %v218
    %v868 = vsub.f32 1.0, %v219
    %v869 = vsub.f32 1.0, %v220
    %v870 = vsub.f32 1.0, %v221
    %v871 = vsub.f32 1.0, %v222
    %v872 = vsub.f32 1.0, %v223
    %v873 = vsub.f32 1.0, %v224
    %v874 = vsub.f32 1.0, %v225
    %v875 = vsub.f32 1.0, %v226
    %v876 = vsub.f32 1.0, %v227
    %v877 = vsub.f32 1.0, %v228
    %v878 = vsub.f32 1.0, %v229
    %v879 = vsub.f32 1.0, %v230
    %v880 = vsub.f32 1.0, %v231
    %v881 = vsub.f32 1.0, %v232
    %v882 = vsub.f32 1.0, %v233
    %v883 = vmul.f32 %v819, 1e+10
    %v884 = vmul.f32 %v820, 1e+10
    %v885 = vmul.f32 %v821, 1e+10
    %v886 = vmul.f32 %v822, 1e+10
    %v887 = vmul.f32 %v823, 1e+10
    %v888 = vmul.f32 %v824, 1e+10
    %v889 = vmul.f32 %v825, 1e+10
    %v890 = vmul.f32 %v826, 1e+10
    %v891 = vmul.f32 %v827, 1e+10
    %v892 = vmul.f32 %v828, 1e+10
    %v893 = vmul.f32 %v829, 1e+10
    %v894 = vmul.f32 %v830, 1e+10
    %v895 = vmul.f32 %v831, 1e+10
    %v896 = vmul.f32 %v832, 1e+10
    %v897 = vmul.f32 %v833, 1e+10
    %v898 = vmul.f32 %v834, 1e+10
    %v899 = vmul.f32 %v835, 1e+10
    %v900 = vmul.f32 %v836, 1e+10
    %v901 = vmul.f32 %v837, 1e+10
    %v902 = vmul.f32 %v838, 1e+10
    %v903 = vmul.f32 %v839, 1e+10
    %v904 = vmul.f32 %v840, 1e+10
    %v905 = vmul.f32 %v841, 1e+10
    %v906 = vmul.f32 %v842, 1e+10
    %v907 = vmul.f32 %v843, 1e+10
    %v908 = vmul.f32 %v844, 1e+10
    %v909 = vmul.f32 %v845, 1e+10
    %v910 = vmul.f32 %v846, 1e+10
    %v911 = vmul.f32 %v847, 1e+10
    %v912 = vmul.f32 %v848, 1e+10
    %v913 = vmul.f32 %v849, 1e+10
    %v914 = vmul.f32 %v850, 1e+10
    %v915 = vmul.f32 %v851, 1e+10
    %v916 = vmul.f32 %v852, 1e+10
    %v917 = vmul.f32 %v853, 1e+10
    %v918 = vmul.f32 %v854, 1e+10
    %v919 = vmul.f32 %v855, 1e+10
    %v920 = vmul.f32 %v856, 1e+10
    %v921 = vmul.f32 %v857, 1e+10
    %v922 = vmul.f32 %v858, 1e+10
    %v923 = vmul.f32 %v859, 1e+10
    %v924 = vmul.f32 %v860, 1e+10
    %v925 = vmul.f32 %v861, 1e+10
    %v926 = vmul.f32 %v862, 1e+10
    %v927 = vmul.f32 %v863, 1e+10
    %v928 = vmul.f32 %v864, 1e+10
    %v929 = vmul.f32 %v865, 1e+10
    %v930 = vmul.f32 %v866, 1e+10
    %v931 = vmul.f32 %v867, 1e+10
    %v932 = vmul.f32 %v868, 1e+10
    %v933 = vmul.f32 %v869, 1e+10
    %v934 = vmul.f32 %v870, 1e+10
    %v935 = vmul.f32 %v871, 1e+10
    %v936 = vmul.f32 %v872, 1e+10
    %v937 = vmul.f32 %v873, 1e+10
    %v938 = vmul.f32 %v874, 1e+10
    %v939 = vmul.f32 %v875, 1e+10
    %v940 = vmul.f32 %v876, 1e+10
    %v941 = vmul.f32 %v877, 1e+10
    %v942 = vmul.f32 %v878, 1e+10
    %v943 = vmul.f32 %v879, 1e+10
    %v944 = vmul.f32 %v880, 1e+10
    %v945 = vmul.f32 %v881, 1e+10
    %v946 = vmul.f32 %v882, 1e+10
    %948 = vset.pattern.permute.xlu0 0
    %949 = vperm.xlu0 %948, %v883
    %v950 = vpop.permute.xlu0 %949
    %953 = vset.pattern.permute.xlu0 0
    %954 = vperm.xlu0 %953, %v884
    %v955 = vpop.permute.xlu0 %954
    %958 = vset.pattern.permute.xlu0 0
    %959 = vperm.xlu0 %958, %v885
    %v960 = vpop.permute.xlu0 %959
    %963 = vset.pattern.permute.xlu0 0
    %964 = vperm.xlu0 %963, %v886
    %v965 = vpop.permute.xlu0 %964
    %968 = vset.pattern.permute.xlu0 0
    %969 = vperm.xlu0 %968, %v887
    %v970 = vpop.permute.xlu0 %969
    %973 = vset.pattern.permute.xlu0 0
    %974 = vperm.xlu0 %973, %v888
    %v975 = vpop.permute.xlu0 %974
    %978 = vset.pattern.permute.xlu0 0
    %979 = vperm.xlu0 %978, %v889
    %v980 = vpop.permute.xlu0 %979
    %983 = vset.pattern.permute.xlu0 0
    %984 = vperm.xlu0 %983, %v890
    %v985 = vpop.permute.xlu0 %984
    %988 = vset.pattern.permute.xlu0 0
    %989 = vperm.xlu0 %988, %v891
    %v990 = vpop.permute.xlu0 %989
    %993 = vset.pattern.permute.xlu0 0
    %994 = vperm.xlu0 %993, %v892
    %v995 = vpop.permute.xlu0 %994
    %998 = vset.pattern.permute.xlu0 0
    %999 = vperm.xlu0 %998, %v893
    %v1000 = vpop.permute.xlu0 %999
    %1003 = vset.pattern.permute.xlu0 0
    %1004 = vperm.xlu0 %1003, %v894
    %v1005 = vpop.permute.xlu0 %1004
    %1008 = vset.pattern.permute.xlu0 0
    %1009 = vperm.xlu0 %1008, %v895
    %v1010 = vpop.permute.xlu0 %1009
    %1013 = vset.pattern.permute.xlu0 0
    %1014 = vperm.xlu0 %1013, %v896
    %v1015 = vpop.permute.xlu0 %1014
    %1018 = vset.pattern.permute.xlu0 0
    %1019 = vperm.xlu0 %1018, %v897
    %v1020 = vpop.permute.xlu0 %1019
    %1023 = vset.pattern.permute.xlu0 0
    %1024 = vperm.xlu0 %1023, %v898
    %v1025 = vpop.permute.xlu0 %1024
    %1028 = vset.pattern.permute.xlu0 0
    %1029 = vperm.xlu0 %1028, %v899
    %v1030 = vpop.permute.xlu0 %1029
    %1033 = vset.pattern.permute.xlu0 0
    %1034 = vperm.xlu0 %1033, %v900
    %v1035 = vpop.permute.xlu0 %1034
    %1038 = vset.pattern.permute.xlu0 0
    %1039 = vperm.xlu0 %1038, %v901
    %v1040 = vpop.permute.xlu0 %1039
    %1043 = vset.pattern.permute.xlu0 0
    %1044 = vperm.xlu0 %1043, %v902
    %v1045 = vpop.permute.xlu0 %1044
    %1048 = vset.pattern.permute.xlu0 0
    %1049 = vperm.xlu0 %1048, %v903
    %v1050 = vpop.permute.xlu0 %1049
    %1053 = vset.pattern.permute.xlu0 0
    %1054 = vperm.xlu0 %1053, %v904
    %v1055 = vpop.permute.xlu0 %1054
    %1058 = vset.pattern.permute.xlu0 0
    %1059 = vperm.xlu0 %1058, %v905
    %v1060 = vpop.permute.xlu0 %1059
    %1063 = vset.pattern.permute.xlu0 0
    %1064 = vperm.xlu0 %1063, %v906
    %v1065 = vpop.permute.xlu0 %1064
    %1068 = vset.pattern.permute.xlu0 0
    %1069 = vperm.xlu0 %1068, %v907
    %v1070 = vpop.permute.xlu0 %1069
    %1073 = vset.pattern.permute.xlu0 0
    %1074 = vperm.xlu0 %1073, %v908
    %v1075 = vpop.permute.xlu0 %1074
    %1078 = vset.pattern.permute.xlu0 0
    %1079 = vperm.xlu0 %1078, %v909
    %v1080 = vpop.permute.xlu0 %1079
    %1083 = vset.pattern.permute.xlu0 0
    %1084 = vperm.xlu0 %1083, %v910
    %v1085 = vpop.permute.xlu0 %1084
    %1088 = vset.pattern.permute.xlu0 0
    %1089 = vperm.xlu0 %1088, %v911
    %v1090 = vpop.permute.xlu0 %1089
    %1093 = vset.pattern.permute.xlu0 0
    %1094 = vperm.xlu0 %1093, %v912
    %v1095 = vpop.permute.xlu0 %1094
    %1098 = vset.pattern.permute.xlu0 0
    %1099 = vperm.xlu0 %1098, %v913
    %v1100 = vpop.permute.xlu0 %1099
    %1103 = vset.pattern.permute.xlu0 0
    %1104 = vperm.xlu0 %1103, %v914
    %v1105 = vpop.permute.xlu0 %1104
    %1108 = vset.pattern.permute.xlu0 0
    %1109 = vperm.xlu0 %1108, %v915
    %v1110 = vpop.permute.xlu0 %1109
    %1113 = vset.pattern.permute.xlu0 0
    %1114 = vperm.xlu0 %1113, %v916
    %v1115 = vpop.permute.xlu0 %1114
    %1118 = vset.pattern.permute.xlu0 0
    %1119 = vperm.xlu0 %1118, %v917
    %v1120 = vpop.permute.xlu0 %1119
    %1123 = vset.pattern.permute.xlu0 0
    %1124 = vperm.xlu0 %1123, %v918
    %v1125 = vpop.permute.xlu0 %1124
    %1128 = vset.pattern.permute.xlu0 0
    %1129 = vperm.xlu0 %1128, %v919
    %v1130 = vpop.permute.xlu0 %1129
    %1133 = vset.pattern.permute.xlu0 0
    %1134 = vperm.xlu0 %1133, %v920
    %v1135 = vpop.permute.xlu0 %1134
    %1138 = vset.pattern.permute.xlu0 0
    %1139 = vperm.xlu0 %1138, %v921
    %v1140 = vpop.permute.xlu0 %1139
    %1143 = vset.pattern.permute.xlu0 0
    %1144 = vperm.xlu0 %1143, %v922
    %v1145 = vpop.permute.xlu0 %1144
    %1148 = vset.pattern.permute.xlu0 0
    %1149 = vperm.xlu0 %1148, %v923
    %v1150 = vpop.permute.xlu0 %1149
    %1153 = vset.pattern.permute.xlu0 0
    %1154 = vperm.xlu0 %1153, %v924
    %v1155 = vpop.permute.xlu0 %1154
    %1158 = vset.pattern.permute.xlu0 0
    %1159 = vperm.xlu0 %1158, %v925
    %v1160 = vpop.permute.xlu0 %1159
    %1163 = vset.pattern.permute.xlu0 0
    %1164 = vperm.xlu0 %1163, %v926
    %v1165 = vpop.permute.xlu0 %1164
    %1168 = vset.pattern.permute.xlu0 0
    %1169 = vperm.xlu0 %1168, %v927
    %v1170 = vpop.permute.xlu0 %1169
    %1173 = vset.pattern.permute.xlu0 0
    %1174 = vperm.xlu0 %1173, %v928
    %v1175 = vpop.permute.xlu0 %1174
    %1178 = vset.pattern.permute.xlu0 0
    %1179 = vperm.xlu0 %1178, %v929
    %v1180 = vpop.permute.xlu0 %1179
    %1183 = vset.pattern.permute.xlu0 0
    %1184 = vperm.xlu0 %1183, %v930
    %v1185 = vpop.permute.xlu0 %1184
    %1188 = vset.pattern.permute.xlu0 0
    %1189 = vperm.xlu0 %1188, %v931
    %v1190 = vpop.permute.xlu0 %1189
    %1193 = vset.pattern.permute.xlu0 0
    %1194 = vperm.xlu0 %1193, %v932
    %v1195 = vpop.permute.xlu0 %1194
    %1198 = vset.pattern.permute.xlu0 0
    %1199 = vperm.xlu0 %1198, %v933
    %v1200 = vpop.permute.xlu0 %1199
    %1203 = vset.pattern.permute.xlu0 0
    %1204 = vperm.xlu0 %1203, %v934
    %v1205 = vpop.permute.xlu0 %1204
    %1208 = vset.pattern.permute.xlu0 0
    %1209 = vperm.xlu0 %1208, %v935
    %v1210 = vpop.permute.xlu0 %1209
    %1213 = vset.pattern.permute.xlu0 0
    %1214 = vperm.xlu0 %1213, %v936
    %v1215 = vpop.permute.xlu0 %1214
    %1218 = vset.pattern.permute.xlu0 0
    %1219 = vperm.xlu0 %1218, %v937
    %v1220 = vpop.permute.xlu0 %1219
    %1223 = vset.pattern.permute.xlu0 0
    %1224 = vperm.xlu0 %1223, %v938
    %v1225 = vpop.permute.xlu0 %1224
    %1228 = vset.pattern.permute.xlu0 0
    %1229 = vperm.xlu0 %1228, %v939
    %v1230 = vpop.permute.xlu0 %1229
    %1233 = vset.pattern.permute.xlu0 0
    %1234 = vperm.xlu0 %1233, %v940
    %v1235 = vpop.permute.xlu0 %1234
    %1238 = vset.pattern.permute.xlu0 0
    %1239 = vperm.xlu0 %1238, %v941
    %v1240 = vpop.permute.xlu0 %1239
    %1243 = vset.pattern.permute.xlu0 0
    %1244 = vperm.xlu0 %1243, %v942
    %v1245 = vpop.permute.xlu0 %1244
    %1248 = vset.pattern.permute.xlu0 0
    %1249 = vperm.xlu0 %1248, %v943
    %v1250 = vpop.permute.xlu0 %1249
    %1253 = vset.pattern.permute.xlu0 0
    %1254 = vperm.xlu0 %1253, %v944
    %v1255 = vpop.permute.xlu0 %1254
    %1258 = vset.pattern.permute.xlu0 0
    %1259 = vperm.xlu0 %1258, %v945
    %v1260 = vpop.permute.xlu0 %1259
    %1263 = vset.pattern.permute.xlu0 0
    %1264 = vperm.xlu0 %1263, %v946
    %v1265 = vpop.permute.xlu0 %1264
    %v1267 = vsub.f32 %v565, %v950
    %v1268 = vsub.f32 %v568, %v955
    %v1269 = vsub.f32 %v573, %v960
    %v1270 = vsub.f32 %v576, %v965
    %v1271 = vsub.f32 %v581, %v970
    %v1272 = vsub.f32 %v584, %v975
    %v1273 = vsub.f32 %v589, %v980
    %v1274 = vsub.f32 %v592, %v985
    %v1275 = vsub.f32 %v597, %v990
    %v1276 = vsub.f32 %v600, %v995
    %v1277 = vsub.f32 %v605, %v1000
    %v1278 = vsub.f32 %v608, %v1005
    %v1279 = vsub.f32 %v613, %v1010
    %v1280 = vsub.f32 %v616, %v1015
    %v1281 = vsub.f32 %v621, %v1020
    %v1282 = vsub.f32 %v624, %v1025
    %v1283 = vsub.f32 %v629, %v1030
    %v1284 = vsub.f32 %v632, %v1035
    %v1285 = vsub.f32 %v637, %v1040
    %v1286 = vsub.f32 %v640, %v1045
    %v1287 = vsub.f32 %v645, %v1050
    %v1288 = vsub.f32 %v648, %v1055
    %v1289 = vsub.f32 %v653, %v1060
    %v1290 = vsub.f32 %v656, %v1065
    %v1291 = vsub.f32 %v661, %v1070
    %v1292 = vsub.f32 %v664, %v1075
    %v1293 = vsub.f32 %v669, %v1080
    %v1294 = vsub.f32 %v672, %v1085
    %v1295 = vsub.f32 %v677, %v1090
    %v1296 = vsub.f32 %v680, %v1095
    %v1297 = vsub.f32 %v685, %v1100
    %v1298 = vsub.f32 %v688, %v1105
    %v1299 = vsub.f32 %v693, %v1110
    %v1300 = vsub.f32 %v696, %v1115
    %v1301 = vsub.f32 %v701, %v1120
    %v1302 = vsub.f32 %v704, %v1125
    %v1303 = vsub.f32 %v709, %v1130
    %v1304 = vsub.f32 %v712, %v1135
    %v1305 = vsub.f32 %v717, %v1140
    %v1306 = vsub.f32 %v720, %v1145
    %v1307 = vsub.f32 %v725, %v1150
    %v1308 = vsub.f32 %v728, %v1155
    %v1309 = vsub.f32 %v733, %v1160
    %v1310 = vsub.f32 %v736, %v1165
    %v1311 = vsub.f32 %v741, %v1170
    %v1312 = vsub.f32 %v744, %v1175
    %v1313 = vsub.f32 %v749, %v1180
    %v1314 = vsub.f32 %v752, %v1185
    %v1315 = vsub.f32 %v757, %v1190
    %v1316 = vsub.f32 %v760, %v1195
    %v1317 = vsub.f32 %v765, %v1200
    %v1318 = vsub.f32 %v768, %v1205
    %v1319 = vsub.f32 %v773, %v1210
    %v1320 = vsub.f32 %v776, %v1215
    %v1321 = vsub.f32 %v781, %v1220
    %v1322 = vsub.f32 %v784, %v1225
    %v1323 = vsub.f32 %v789, %v1230
    %v1324 = vsub.f32 %v792, %v1235
    %v1325 = vsub.f32 %v797, %v1240
    %v1326 = vsub.f32 %v800, %v1245
    %v1327 = vsub.f32 %v805, %v1250
    %v1328 = vsub.f32 %v808, %v1255
    %v1329 = vsub.f32 %v813, %v1260
    %v1330 = vsub.f32 %v816, %v1265
    %v1331 = vmax.f32 %v1267, -30.0
    %v1332 = vmax.f32 %v1268, -30.0
    %v1333 = vmax.f32 %v1269, -30.0
    %v1334 = vmax.f32 %v1270, -30.0
    %v1335 = vmax.f32 %v1271, -30.0
    %v1336 = vmax.f32 %v1272, -30.0
    %v1337 = vmax.f32 %v1273, -30.0
    %v1338 = vmax.f32 %v1274, -30.0
    %v1339 = vmax.f32 %v1275, -30.0
    %v1340 = vmax.f32 %v1276, -30.0
    %v1341 = vmax.f32 %v1277, -30.0
    %v1342 = vmax.f32 %v1278, -30.0
    %v1343 = vmax.f32 %v1279, -30.0
    %v1344 = vmax.f32 %v1280, -30.0
    %v1345 = vmax.f32 %v1281, -30.0
    %v1346 = vmax.f32 %v1282, -30.0
    %v1347 = vmax.f32 %v1283, -30.0
    %v1348 = vmax.f32 %v1284, -30.0
    %v1349 = vmax.f32 %v1285, -30.0
    %v1350 = vmax.f32 %v1286, -30.0
    %v1351 = vmax.f32 %v1287, -30.0
    %v1352 = vmax.f32 %v1288, -30.0
    %v1353 = vmax.f32 %v1289, -30.0
    %v1354 = vmax.f32 %v1290, -30.0
    %v1355 = vmax.f32 %v1291, -30.0
    %v1356 = vmax.f32 %v1292, -30.0
    %v1357 = vmax.f32 %v1293, -30.0
    %v1358 = vmax.f32 %v1294, -30.0
    %v1359 = vmax.f32 %v1295, -30.0
    %v1360 = vmax.f32 %v1296, -30.0
    %v1361 = vmax.f32 %v1297, -30.0
    %v1362 = vmax.f32 %v1298, -30.0
    %v1363 = vmax.f32 %v1299, -30.0
    %v1364 = vmax.f32 %v1300, -30.0
    %v1365 = vmax.f32 %v1301, -30.0
    %v1366 = vmax.f32 %v1302, -30.0
    %v1367 = vmax.f32 %v1303, -30.0
    %v1368 = vmax.f32 %v1304, -30.0
    %v1369 = vmax.f32 %v1305, -30.0
    %v1370 = vmax.f32 %v1306, -30.0
    %v1371 = vmax.f32 %v1307, -30.0
    %v1372 = vmax.f32 %v1308, -30.0
    %v1373 = vmax.f32 %v1309, -30.0
    %v1374 = vmax.f32 %v1310, -30.0
    %v1375 = vmax.f32 %v1311, -30.0
    %v1376 = vmax.f32 %v1312, -30.0
    %v1377 = vmax.f32 %v1313, -30.0
    %v1378 = vmax.f32 %v1314, -30.0
    %v1379 = vmax.f32 %v1315, -30.0
    %v1380 = vmax.f32 %v1316, -30.0
    %v1381 = vmax.f32 %v1317, -30.0
    %v1382 = vmax.f32 %v1318, -30.0
    %v1383 = vmax.f32 %v1319, -30.0
    %v1384 = vmax.f32 %v1320, -30.0
    %v1385 = vmax.f32 %v1321, -30.0
    %v1386 = vmax.f32 %v1322, -30.0
    %v1387 = vmax.f32 %v1323, -30.0
    %v1388 = vmax.f32 %v1324, -30.0
    %v1389 = vmax.f32 %v1325, -30.0
    %v1390 = vmax.f32 %v1326, -30.0
    %v1391 = vmax.f32 %v1327, -30.0
    %v1392 = vmax.f32 %v1328, -30.0
    %v1393 = vmax.f32 %v1329, -30.0
    %v1394 = vmax.f32 %v1330, -30.0
    %v1395 = vmin.f32 %v1331, 30.0
    %v1396 = vmin.f32 %v1332, 30.0
    %v1397 = vmin.f32 %v1333, 30.0
    %v1398 = vmin.f32 %v1334, 30.0
    %v1399 = vmin.f32 %v1335, 30.0
    %v1400 = vmin.f32 %v1336, 30.0
    %v1401 = vmin.f32 %v1337, 30.0
    %v1402 = vmin.f32 %v1338, 30.0
    %v1403 = vmin.f32 %v1339, 30.0
    %v1404 = vmin.f32 %v1340, 30.0
    %v1405 = vmin.f32 %v1341, 30.0
    %v1406 = vmin.f32 %v1342, 30.0
    %v1407 = vmin.f32 %v1343, 30.0
    %v1408 = vmin.f32 %v1344, 30.0
    %v1409 = vmin.f32 %v1345, 30.0
    %v1410 = vmin.f32 %v1346, 30.0
    %v1411 = vmin.f32 %v1347, 30.0
    %v1412 = vmin.f32 %v1348, 30.0
    %v1413 = vmin.f32 %v1349, 30.0
    %v1414 = vmin.f32 %v1350, 30.0
    %v1415 = vmin.f32 %v1351, 30.0
    %v1416 = vmin.f32 %v1352, 30.0
    %v1417 = vmin.f32 %v1353, 30.0
    %v1418 = vmin.f32 %v1354, 30.0
    %v1419 = vmin.f32 %v1355, 30.0
    %v1420 = vmin.f32 %v1356, 30.0
    %v1421 = vmin.f32 %v1357, 30.0
    %v1422 = vmin.f32 %v1358, 30.0
    %v1423 = vmin.f32 %v1359, 30.0
    %v1424 = vmin.f32 %v1360, 30.0
    %v1425 = vmin.f32 %v1361, 30.0
    %v1426 = vmin.f32 %v1362, 30.0
    %v1427 = vmin.f32 %v1363, 30.0
    %v1428 = vmin.f32 %v1364, 30.0
    %v1429 = vmin.f32 %v1365, 30.0
    %v1430 = vmin.f32 %v1366, 30.0
    %v1431 = vmin.f32 %v1367, 30.0
    %v1432 = vmin.f32 %v1368, 30.0
    %v1433 = vmin.f32 %v1369, 30.0
    %v1434 = vmin.f32 %v1370, 30.0
    %v1435 = vmin.f32 %v1371, 30.0
    %v1436 = vmin.f32 %v1372, 30.0
    %v1437 = vmin.f32 %v1373, 30.0
    %v1438 = vmin.f32 %v1374, 30.0
    %v1439 = vmin.f32 %v1375, 30.0
    %v1440 = vmin.f32 %v1376, 30.0
    %v1441 = vmin.f32 %v1377, 30.0
    %v1442 = vmin.f32 %v1378, 30.0
    %v1443 = vmin.f32 %v1379, 30.0
    %v1444 = vmin.f32 %v1380, 30.0
    %v1445 = vmin.f32 %v1381, 30.0
    %v1446 = vmin.f32 %v1382, 30.0
    %v1447 = vmin.f32 %v1383, 30.0
    %v1448 = vmin.f32 %v1384, 30.0
    %v1449 = vmin.f32 %v1385, 30.0
    %v1450 = vmin.f32 %v1386, 30.0
    %v1451 = vmin.f32 %v1387, 30.0
    %v1452 = vmin.f32 %v1388, 30.0
    %v1453 = vmin.f32 %v1389, 30.0
    %v1454 = vmin.f32 %v1390, 30.0
    %v1455 = vmin.f32 %v1391, 30.0
    %v1456 = vmin.f32 %v1392, 30.0
    %v1457 = vmin.f32 %v1393, 30.0
    %v1458 = vmin.f32 %v1394, 30.0
    %v1459 = vsub.f32 0.0, %v1395
    %v1460 = vsub.f32 0.0, %v1396
    %v1461 = vsub.f32 0.0, %v1397
    %v1462 = vsub.f32 0.0, %v1398
    %v1463 = vsub.f32 0.0, %v1399
    %v1464 = vsub.f32 0.0, %v1400
    %v1465 = vsub.f32 0.0, %v1401
    %v1466 = vsub.f32 0.0, %v1402
    %v1467 = vsub.f32 0.0, %v1403
    %v1468 = vsub.f32 0.0, %v1404
    %v1469 = vsub.f32 0.0, %v1405
    %v1470 = vsub.f32 0.0, %v1406
    %v1471 = vsub.f32 0.0, %v1407
    %v1472 = vsub.f32 0.0, %v1408
    %v1473 = vsub.f32 0.0, %v1409
    %v1474 = vsub.f32 0.0, %v1410
    %v1475 = vsub.f32 0.0, %v1411
    %v1476 = vsub.f32 0.0, %v1412
    %v1477 = vsub.f32 0.0, %v1413
    %v1478 = vsub.f32 0.0, %v1414
    %v1479 = vsub.f32 0.0, %v1415
    %v1480 = vsub.f32 0.0, %v1416
    %v1481 = vsub.f32 0.0, %v1417
    %v1482 = vsub.f32 0.0, %v1418
    %v1483 = vsub.f32 0.0, %v1419
    %v1484 = vsub.f32 0.0, %v1420
    %v1485 = vsub.f32 0.0, %v1421
    %v1486 = vsub.f32 0.0, %v1422
    %v1487 = vsub.f32 0.0, %v1423
    %v1488 = vsub.f32 0.0, %v1424
    %v1489 = vsub.f32 0.0, %v1425
    %v1490 = vsub.f32 0.0, %v1426
    %v1491 = vsub.f32 0.0, %v1427
    %v1492 = vsub.f32 0.0, %v1428
    %v1493 = vsub.f32 0.0, %v1429
    %v1494 = vsub.f32 0.0, %v1430
    %v1495 = vsub.f32 0.0, %v1431
    %v1496 = vsub.f32 0.0, %v1432
    %v1497 = vsub.f32 0.0, %v1433
    %v1498 = vsub.f32 0.0, %v1434
    %v1499 = vsub.f32 0.0, %v1435
    %v1500 = vsub.f32 0.0, %v1436
    %v1501 = vsub.f32 0.0, %v1437
    %v1502 = vsub.f32 0.0, %v1438
    %v1503 = vsub.f32 0.0, %v1439
    %v1504 = vsub.f32 0.0, %v1440
    %v1505 = vsub.f32 0.0, %v1441
    %v1506 = vsub.f32 0.0, %v1442
    %v1507 = vsub.f32 0.0, %v1443
    %v1508 = vsub.f32 0.0, %v1444
    %v1509 = vsub.f32 0.0, %v1445
    %v1510 = vsub.f32 0.0, %v1446
    %v1511 = vsub.f32 0.0, %v1447
    %v1512 = vsub.f32 0.0, %v1448
    %v1513 = vsub.f32 0.0, %v1449
    %v1514 = vsub.f32 0.0, %v1450
    %v1515 = vsub.f32 0.0, %v1451
    %v1516 = vsub.f32 0.0, %v1452
    %v1517 = vsub.f32 0.0, %v1453
    %v1518 = vsub.f32 0.0, %v1454
    %v1519 = vsub.f32 0.0, %v1455
    %v1520 = vsub.f32 0.0, %v1456
    %v1521 = vsub.f32 0.0, %v1457
    %v1522 = vsub.f32 0.0, %v1458
    %v1523 = vmul.f32 %v1459, 1.442695
    %v1524 = vpow.pop %v1523
    %v1525 = vmul.f32 %v1460, 1.442695
    %v1526 = vpow.pop %v1525
    %v1527 = vmul.f32 %v1461, 1.442695
    %v1528 = vpow.pop %v1527
    %v1529 = vmul.f32 %v1462, 1.442695
    %v1530 = vpow.pop %v1529
    %v1531 = vmul.f32 %v1463, 1.442695
    %v1532 = vpow.pop %v1531
    %v1533 = vmul.f32 %v1464, 1.442695
    %v1534 = vpow.pop %v1533
    %v1535 = vmul.f32 %v1465, 1.442695
    %v1536 = vpow.pop %v1535
    %v1537 = vmul.f32 %v1466, 1.442695
    %v1538 = vpow.pop %v1537
    %v1539 = vmul.f32 %v1467, 1.442695
    %v1540 = vpow.pop %v1539
    %v1541 = vmul.f32 %v1468, 1.442695
    %v1542 = vpow.pop %v1541
    %v1543 = vmul.f32 %v1469, 1.442695
    %v1544 = vpow.pop %v1543
    %v1545 = vmul.f32 %v1470, 1.442695
    %v1546 = vpow.pop %v1545
    %v1547 = vmul.f32 %v1471, 1.442695
    %v1548 = vpow.pop %v1547
    %v1549 = vmul.f32 %v1472, 1.442695
    %v1550 = vpow.pop %v1549
    %v1551 = vmul.f32 %v1473, 1.442695
    %v1552 = vpow.pop %v1551
    %v1553 = vmul.f32 %v1474, 1.442695
    %v1554 = vpow.pop %v1553
    %v1555 = vmul.f32 %v1475, 1.442695
    %v1556 = vpow.pop %v1555
    %v1557 = vmul.f32 %v1476, 1.442695
    %v1558 = vpow.pop %v1557
    %v1559 = vmul.f32 %v1477, 1.442695
    %v1560 = vpow.pop %v1559
    %v1561 = vmul.f32 %v1478, 1.442695
    %v1562 = vpow.pop %v1561
    %v1563 = vmul.f32 %v1479, 1.442695
    %v1564 = vpow.pop %v1563
    %v1565 = vmul.f32 %v1480, 1.442695
    %v1566 = vpow.pop %v1565
    %v1567 = vmul.f32 %v1481, 1.442695
    %v1568 = vpow.pop %v1567
    %v1569 = vmul.f32 %v1482, 1.442695
    %v1570 = vpow.pop %v1569
    %v1571 = vmul.f32 %v1483, 1.442695
    %v1572 = vpow.pop %v1571
    %v1573 = vmul.f32 %v1484, 1.442695
    %v1574 = vpow.pop %v1573
    %v1575 = vmul.f32 %v1485, 1.442695
    %v1576 = vpow.pop %v1575
    %v1577 = vmul.f32 %v1486, 1.442695
    %v1578 = vpow.pop %v1577
    %v1579 = vmul.f32 %v1487, 1.442695
    %v1580 = vpow.pop %v1579
    %v1581 = vmul.f32 %v1488, 1.442695
    %v1582 = vpow.pop %v1581
    %v1583 = vmul.f32 %v1489, 1.442695
    %v1584 = vpow.pop %v1583
    %v1585 = vmul.f32 %v1490, 1.442695
    %v1586 = vpow.pop %v1585
    %v1587 = vmul.f32 %v1491, 1.442695
    %v1588 = vpow.pop %v1587
    %v1589 = vmul.f32 %v1492, 1.442695
    %v1590 = vpow.pop %v1589
    %v1591 = vmul.f32 %v1493, 1.442695
    %v1592 = vpow.pop %v1591
    %v1593 = vmul.f32 %v1494, 1.442695
    %v1594 = vpow.pop %v1593
    %v1595 = vmul.f32 %v1495, 1.442695
    %v1596 = vpow.pop %v1595
    %v1597 = vmul.f32 %v1496, 1.442695
    %v1598 = vpow.pop %v1597
    %v1599 = vmul.f32 %v1497, 1.442695
    %v1600 = vpow.pop %v1599
    %v1601 = vmul.f32 %v1498, 1.442695
    %v1602 = vpow.pop %v1601
    %v1603 = vmul.f32 %v1499, 1.442695
    %v1604 = vpow.pop %v1603
    %v1605 = vmul.f32 %v1500, 1.442695
    %v1606 = vpow.pop %v1605
    %v1607 = vmul.f32 %v1501, 1.442695
    %v1608 = vpow.pop %v1607
    %v1609 = vmul.f32 %v1502, 1.442695
    %v1610 = vpow.pop %v1609
    %v1611 = vmul.f32 %v1503, 1.442695
    %v1612 = vpow.pop %v1611
    %v1613 = vmul.f32 %v1504, 1.442695
    %v1614 = vpow.pop %v1613
    %v1615 = vmul.f32 %v1505, 1.442695
    %v1616 = vpow.pop %v1615
    %v1617 = vmul.f32 %v1506, 1.442695
    %v1618 = vpow.pop %v1617
    %v1619 = vmul.f32 %v1507, 1.442695
    %v1620 = vpow.pop %v1619
    %v1621 = vmul.f32 %v1508, 1.442695
    %v1622 = vpow.pop %v1621
    %v1623 = vmul.f32 %v1509, 1.442695
    %v1624 = vpow.pop %v1623
    %v1625 = vmul.f32 %v1510, 1.442695
    %v1626 = vpow.pop %v1625
    %v1627 = vmul.f32 %v1511, 1.442695
    %v1628 = vpow.pop %v1627
    %v1629 = vmul.f32 %v1512, 1.442695
    %v1630 = vpow.pop %v1629
    %v1631 = vmul.f32 %v1513, 1.442695
    %v1632 = vpow.pop %v1631
    %v1633 = vmul.f32 %v1514, 1.442695
    %v1634 = vpow.pop %v1633
    %v1635 = vmul.f32 %v1515, 1.442695
    %v1636 = vpow.pop %v1635
    %v1637 = vmul.f32 %v1516, 1.442695
    %v1638 = vpow.pop %v1637
    %v1639 = vmul.f32 %v1517, 1.442695
    %v1640 = vpow.pop %v1639
    %v1641 = vmul.f32 %v1518, 1.442695
    %v1642 = vpow.pop %v1641
    %v1643 = vmul.f32 %v1519, 1.442695
    %v1644 = vpow.pop %v1643
    %v1645 = vmul.f32 %v1520, 1.442695
    %v1646 = vpow.pop %v1645
    %v1647 = vmul.f32 %v1521, 1.442695
    %v1648 = vpow.pop %v1647
    %v1649 = vmul.f32 %v1522, 1.442695
    %v1650 = vpow.pop %v1649
    %v1651 = vadd.f32 %v1524, 1.0
    %v1652 = vadd.f32 %v1526, 1.0
    %v1653 = vadd.f32 %v1528, 1.0
    %v1654 = vadd.f32 %v1530, 1.0
    %v1655 = vadd.f32 %v1532, 1.0
    %v1656 = vadd.f32 %v1534, 1.0
    %v1657 = vadd.f32 %v1536, 1.0
    %v1658 = vadd.f32 %v1538, 1.0
    %v1659 = vadd.f32 %v1540, 1.0
    %v1660 = vadd.f32 %v1542, 1.0
    %v1661 = vadd.f32 %v1544, 1.0
    %v1662 = vadd.f32 %v1546, 1.0
    %v1663 = vadd.f32 %v1548, 1.0
    %v1664 = vadd.f32 %v1550, 1.0
    %v1665 = vadd.f32 %v1552, 1.0
    %v1666 = vadd.f32 %v1554, 1.0
    %v1667 = vadd.f32 %v1556, 1.0
    %v1668 = vadd.f32 %v1558, 1.0
    %v1669 = vadd.f32 %v1560, 1.0
    %v1670 = vadd.f32 %v1562, 1.0
    %v1671 = vadd.f32 %v1564, 1.0
    %v1672 = vadd.f32 %v1566, 1.0
    %v1673 = vadd.f32 %v1568, 1.0
    %v1674 = vadd.f32 %v1570, 1.0
    %v1675 = vadd.f32 %v1572, 1.0
    %v1676 = vadd.f32 %v1574, 1.0
    %v1677 = vadd.f32 %v1576, 1.0
    %v1678 = vadd.f32 %v1578, 1.0
    %v1679 = vadd.f32 %v1580, 1.0
    %v1680 = vadd.f32 %v1582, 1.0
    %v1681 = vadd.f32 %v1584, 1.0
    %v1682 = vadd.f32 %v1586, 1.0
    %v1683 = vadd.f32 %v1588, 1.0
    %v1684 = vadd.f32 %v1590, 1.0
    %v1685 = vadd.f32 %v1592, 1.0
    %v1686 = vadd.f32 %v1594, 1.0
    %v1687 = vadd.f32 %v1596, 1.0
    %v1688 = vadd.f32 %v1598, 1.0
    %v1689 = vadd.f32 %v1600, 1.0
    %v1690 = vadd.f32 %v1602, 1.0
    %v1691 = vadd.f32 %v1604, 1.0
    %v1692 = vadd.f32 %v1606, 1.0
    %v1693 = vadd.f32 %v1608, 1.0
    %v1694 = vadd.f32 %v1610, 1.0
    %v1695 = vadd.f32 %v1612, 1.0
    %v1696 = vadd.f32 %v1614, 1.0
    %v1697 = vadd.f32 %v1616, 1.0
    %v1698 = vadd.f32 %v1618, 1.0
    %v1699 = vadd.f32 %v1620, 1.0
    %v1700 = vadd.f32 %v1622, 1.0
    %v1701 = vadd.f32 %v1624, 1.0
    %v1702 = vadd.f32 %v1626, 1.0
    %v1703 = vadd.f32 %v1628, 1.0
    %v1704 = vadd.f32 %v1630, 1.0
    %v1705 = vadd.f32 %v1632, 1.0
    %v1706 = vadd.f32 %v1634, 1.0
    %v1707 = vadd.f32 %v1636, 1.0
    %v1708 = vadd.f32 %v1638, 1.0
    %v1709 = vadd.f32 %v1640, 1.0
    %v1710 = vadd.f32 %v1642, 1.0
    %v1711 = vadd.f32 %v1644, 1.0
    %v1712 = vadd.f32 %v1646, 1.0
    %v1713 = vadd.f32 %v1648, 1.0
    %v1714 = vadd.f32 %v1650, 1.0
    %v1715 = vrcp.pop %v1651
    %v1716 = vrcp.pop %v1652
    %v1717 = vrcp.pop %v1653
    %v1718 = vrcp.pop %v1654
    %v1719 = vrcp.pop %v1655
    %v1720 = vrcp.pop %v1656
    %v1721 = vrcp.pop %v1657
    %v1722 = vrcp.pop %v1658
    %v1723 = vrcp.pop %v1659
    %v1724 = vrcp.pop %v1660
    %v1725 = vrcp.pop %v1661
    %v1726 = vrcp.pop %v1662
    %v1727 = vrcp.pop %v1663
    %v1728 = vrcp.pop %v1664
    %v1729 = vrcp.pop %v1665
    %v1730 = vrcp.pop %v1666
    %v1731 = vrcp.pop %v1667
    %v1732 = vrcp.pop %v1668
    %v1733 = vrcp.pop %v1669
    %v1734 = vrcp.pop %v1670
    %v1735 = vrcp.pop %v1671
    %v1736 = vrcp.pop %v1672
    %v1737 = vrcp.pop %v1673
    %v1738 = vrcp.pop %v1674
    %v1739 = vrcp.pop %v1675
    %v1740 = vrcp.pop %v1676
    %v1741 = vrcp.pop %v1677
    %v1742 = vrcp.pop %v1678
    %v1743 = vrcp.pop %v1679
    %v1744 = vrcp.pop %v1680
    %v1745 = vrcp.pop %v1681
    %v1746 = vrcp.pop %v1682
    %v1747 = vrcp.pop %v1683
    %v1748 = vrcp.pop %v1684
    %v1749 = vrcp.pop %v1685
    %v1750 = vrcp.pop %v1686
    %v1751 = vrcp.pop %v1687
    %v1752 = vrcp.pop %v1688
    %v1753 = vrcp.pop %v1689
    %v1754 = vrcp.pop %v1690
    %v1755 = vrcp.pop %v1691
    %v1756 = vrcp.pop %v1692
    %v1757 = vrcp.pop %v1693
    %v1758 = vrcp.pop %v1694
    %v1759 = vrcp.pop %v1695
    %v1760 = vrcp.pop %v1696
    %v1761 = vrcp.pop %v1697
    %v1762 = vrcp.pop %v1698
    %v1763 = vrcp.pop %v1699
    %v1764 = vrcp.pop %v1700
    %v1765 = vrcp.pop %v1701
    %v1766 = vrcp.pop %v1702
    %v1767 = vrcp.pop %v1703
    %v1768 = vrcp.pop %v1704
    %v1769 = vrcp.pop %v1705
    %v1770 = vrcp.pop %v1706
    %v1771 = vrcp.pop %v1707
    %v1772 = vrcp.pop %v1708
    %v1773 = vrcp.pop %v1709
    %v1774 = vrcp.pop %v1710
    %v1775 = vrcp.pop %v1711
    %v1776 = vrcp.pop %v1712
    %v1777 = vrcp.pop %v1713
    %v1778 = vrcp.pop %v1714
    %1779 = vxpose.xlu0.b32.start [1/16] %v1267, 128
    %1780 = vxpose.xlu0.b32.cont [2/16] %v1268, 128
    %1781 = vxpose.xlu0.b32.cont [3/16] %v1269, 128
    %1782 = vxpose.xlu0.b32.cont [4/16] %v1270, 128
    %1783 = vxpose.xlu0.b32.cont [5/16] %v1271, 128
    %1784 = vxpose.xlu0.b32.cont [6/16] %v1272, 128
    %1785 = vxpose.xlu0.b32.cont [7/16] %v1273, 128
    %1786 = vxpose.xlu0.b32.cont [8/16] %v1274, 128
    %1787 = vxpose.xlu0.b32.cont [9/16] %v1275, 128
    %1788 = vxpose.xlu0.b32.cont [10/16] %v1276, 128
    %1789 = vxpose.xlu0.b32.cont [11/16] %v1277, 128
    %1790 = vxpose.xlu0.b32.cont [12/16] %v1278, 128
    %1791 = vxpose.xlu0.b32.cont [13/16] %v1279, 128
    %1792 = vxpose.xlu0.b32.cont [14/16] %v1280, 128
    %1793 = vxpose.xlu0.b32.cont [15/16] %v1281, 128
    %1794 = vxpose.xlu0.b32.end [16/16] %v1282, 128
    %v1795 = vpop.trf.xlu0
    %v1796 = vpop.trf.xlu0
    %v1797 = vpop.trf.xlu0
    %v1798 = vpop.trf.xlu0
    %v1799 = vpop.trf.xlu0
    %v1800 = vpop.trf.xlu0
    %v1801 = vpop.trf.xlu0
    %v1802 = vpop.trf.xlu0
    %v1803 = vpop.trf.xlu0
    %v1804 = vpop.trf.xlu0
    %v1805 = vpop.trf.xlu0
    %v1806 = vpop.trf.xlu0
    %v1807 = vpop.trf.xlu0
    %v1808 = vpop.trf.xlu0
    %v1809 = vpop.trf.xlu0
    %v1810 = vpop.trf.xlu0
    %1811 = vxpose.xlu0.b32.start [1/16] %v1283, 128
    %1812 = vxpose.xlu0.b32.cont [2/16] %v1284, 128
    %1813 = vxpose.xlu0.b32.cont [3/16] %v1285, 128
    %1814 = vxpose.xlu0.b32.cont [4/16] %v1286, 128
    %1815 = vxpose.xlu0.b32.cont [5/16] %v1287, 128
    %1816 = vxpose.xlu0.b32.cont [6/16] %v1288, 128
    %1817 = vxpose.xlu0.b32.cont [7/16] %v1289, 128
    %1818 = vxpose.xlu0.b32.cont [8/16] %v1290, 128
    %1819 = vxpose.xlu0.b32.cont [9/16] %v1291, 128
    %1820 = vxpose.xlu0.b32.cont [10/16] %v1292, 128
    %1821 = vxpose.xlu0.b32.cont [11/16] %v1293, 128
    %1822 = vxpose.xlu0.b32.cont [12/16] %v1294, 128
    %1823 = vxpose.xlu0.b32.cont [13/16] %v1295, 128
    %1824 = vxpose.xlu0.b32.cont [14/16] %v1296, 128
    %1825 = vxpose.xlu0.b32.cont [15/16] %v1297, 128
    %1826 = vxpose.xlu0.b32.end [16/16] %v1298, 128
    %v1827 = vpop.trf.xlu0
    %v1828 = vpop.trf.xlu0
    %v1829 = vpop.trf.xlu0
    %v1830 = vpop.trf.xlu0
    %v1831 = vpop.trf.xlu0
    %v1832 = vpop.trf.xlu0
    %v1833 = vpop.trf.xlu0
    %v1834 = vpop.trf.xlu0
    %v1835 = vpop.trf.xlu0
    %v1836 = vpop.trf.xlu0
    %v1837 = vpop.trf.xlu0
    %v1838 = vpop.trf.xlu0
    %v1839 = vpop.trf.xlu0
    %v1840 = vpop.trf.xlu0
    %v1841 = vpop.trf.xlu0
    %v1842 = vpop.trf.xlu0
    %1843 = vxpose.xlu0.b32.start [1/16] %v1299, 128
    %1844 = vxpose.xlu0.b32.cont [2/16] %v1300, 128
    %1845 = vxpose.xlu0.b32.cont [3/16] %v1301, 128
    %1846 = vxpose.xlu0.b32.cont [4/16] %v1302, 128
    %1847 = vxpose.xlu0.b32.cont [5/16] %v1303, 128
    %1848 = vxpose.xlu0.b32.cont [6/16] %v1304, 128
    %1849 = vxpose.xlu0.b32.cont [7/16] %v1305, 128
    %1850 = vxpose.xlu0.b32.cont [8/16] %v1306, 128
    %1851 = vxpose.xlu0.b32.cont [9/16] %v1307, 128
    %1852 = vxpose.xlu0.b32.cont [10/16] %v1308, 128
    %1853 = vxpose.xlu0.b32.cont [11/16] %v1309, 128
    %1854 = vxpose.xlu0.b32.cont [12/16] %v1310, 128
    %1855 = vxpose.xlu0.b32.cont [13/16] %v1311, 128
    %1856 = vxpose.xlu0.b32.cont [14/16] %v1312, 128
    %1857 = vxpose.xlu0.b32.cont [15/16] %v1313, 128
    %1858 = vxpose.xlu0.b32.end [16/16] %v1314, 128
    %v1859 = vpop.trf.xlu0
    %v1860 = vpop.trf.xlu0
    %v1861 = vpop.trf.xlu0
    %v1862 = vpop.trf.xlu0
    %v1863 = vpop.trf.xlu0
    %v1864 = vpop.trf.xlu0
    %v1865 = vpop.trf.xlu0
    %v1866 = vpop.trf.xlu0
    %v1867 = vpop.trf.xlu0
    %v1868 = vpop.trf.xlu0
    %v1869 = vpop.trf.xlu0
    %v1870 = vpop.trf.xlu0
    %v1871 = vpop.trf.xlu0
    %v1872 = vpop.trf.xlu0
    %v1873 = vpop.trf.xlu0
    %v1874 = vpop.trf.xlu0
    %1875 = vxpose.xlu0.b32.start [1/16] %v1315, 128
    %1876 = vxpose.xlu0.b32.cont [2/16] %v1316, 128
    %1877 = vxpose.xlu0.b32.cont [3/16] %v1317, 128
    %1878 = vxpose.xlu0.b32.cont [4/16] %v1318, 128
    %1879 = vxpose.xlu0.b32.cont [5/16] %v1319, 128
    %1880 = vxpose.xlu0.b32.cont [6/16] %v1320, 128
    %1881 = vxpose.xlu0.b32.cont [7/16] %v1321, 128
    %1882 = vxpose.xlu0.b32.cont [8/16] %v1322, 128
    %1883 = vxpose.xlu0.b32.cont [9/16] %v1323, 128
    %1884 = vxpose.xlu0.b32.cont [10/16] %v1324, 128
    %1885 = vxpose.xlu0.b32.cont [11/16] %v1325, 128
    %1886 = vxpose.xlu0.b32.cont [12/16] %v1326, 128
    %1887 = vxpose.xlu0.b32.cont [13/16] %v1327, 128
    %1888 = vxpose.xlu0.b32.cont [14/16] %v1328, 128
    %1889 = vxpose.xlu0.b32.cont [15/16] %v1329, 128
    %1890 = vxpose.xlu0.b32.end [16/16] %v1330, 128
    %v1891 = vpop.trf.xlu0
    %v1892 = vpop.trf.xlu0
    %v1893 = vpop.trf.xlu0
    %v1894 = vpop.trf.xlu0
    %v1895 = vpop.trf.xlu0
    %v1896 = vpop.trf.xlu0
    %v1897 = vpop.trf.xlu0
    %v1898 = vpop.trf.xlu0
    %v1899 = vpop.trf.xlu0
    %v1900 = vpop.trf.xlu0
    %v1901 = vpop.trf.xlu0
    %v1902 = vpop.trf.xlu0
    %v1903 = vpop.trf.xlu0
    %v1904 = vpop.trf.xlu0
    %v1905 = vpop.trf.xlu0
    %v1906 = vpop.trf.xlu0
    %v1907 = vmax.f32 %v1795, -30.0
    %v1908 = vmax.f32 %v1827, -30.0
    %v1909 = vmax.f32 %v1859, -30.0
    %v1910 = vmax.f32 %v1891, -30.0
    %v1911 = vmin.f32 %v1907, 30.0
    %v1912 = vmin.f32 %v1908, 30.0
    %v1913 = vmin.f32 %v1909, 30.0
    %v1914 = vmin.f32 %v1910, 30.0
    %v1915 = vsub.f32 0.0, %v1911
    %v1916 = vsub.f32 0.0, %v1912
    %v1917 = vsub.f32 0.0, %v1913
    %v1918 = vsub.f32 0.0, %v1914
    %v1919 = vmul.f32 %v1915, 1.442695
    %v1920 = vpow.pop %v1919
    %v1921 = vmul.f32 %v1916, 1.442695
    %v1922 = vpow.pop %v1921
    %v1923 = vmul.f32 %v1917, 1.442695
    %v1924 = vpow.pop %v1923
    %v1925 = vmul.f32 %v1918, 1.442695
    %v1926 = vpow.pop %v1925
    %v1927 = vadd.f32 %v1920, 1.0
    %v1928 = vadd.f32 %v1922, 1.0
    %v1929 = vadd.f32 %v1924, 1.0
    %v1930 = vadd.f32 %v1926, 1.0
    %v1931 = vrcp.pop %v1927
    %v1932 = vrcp.pop %v1928
    %v1933 = vrcp.pop %v1929
    %v1934 = vrcp.pop %v1930
    %v1939 = vcombine.low %v1931, %v1932
    %v1940 = vcombine.low %v1933, %v1934
    %v1942 = vunpack.c.l.s4 1966171168
    %v1943 = vunpack.c.0.s8 %v1942
    %v1944 = vlaneseq
    %v1945 = vshrl.u32 %v1944, 7
    %v1946 = vsub.s32 %v1943, %v1945
    %v1947 = vrot.slane %v1939, %v1946
    %v1949 = vunpack.c.l.s4 1966171168
    %v1950 = vunpack.c.0.s8 %v1949
    %v1951 = vlaneseq
    %v1952 = vshrl.u32 %v1951, 7
    %v1953 = vsub.s32 %v1950, %v1952
    %v1954 = vrot.slane %v1940, %v1953
    %v1955 = vcombine.low %v1947, %v1954
    %v1957 = vunpack.c.l.s4 1966171168
    %v1958 = vunpack.c.0.s8 %v1957
    %v1959 = vlaneseq
    %v1960 = vshrl.u32 %v1959, 7
    %v1961 = vsub.s32 %v1958, %v1960
    %v1962 = vrot.slane %v1955, %v1961
    %v1964 = vlaneseq
    %vm1965 = vcmp.ge.s32.totalorder %v1964, 0
    %vm1966 = vcmp.lt.s32.totalorder %v1964, 512
    %vm1967 = vmand %vm1965, %vm1966
    %1968 = vst.msk [vmem:[#allocation13] ss:$2 sm:$0xf] %vm1967, %v1962
    %v1973 = vcombine.low %v1795, %v1827
    %v1974 = vcombine.low %v1859, %v1891
    %v1976 = vunpack.c.l.s4 1966171168
    %v1977 = vunpack.c.0.s8 %v1976
    %v1978 = vlaneseq
    %v1979 = vshrl.u32 %v1978, 7
    %v1980 = vsub.s32 %v1977, %v1979
    %v1981 = vrot.slane %v1973, %v1980
    %v1983 = vunpack.c.l.s4 1966171168
    %v1984 = vunpack.c.0.s8 %v1983
    %v1985 = vlaneseq
    %v1986 = vshrl.u32 %v1985, 7
    %v1987 = vsub.s32 %v1984, %v1986
    %v1988 = vrot.slane %v1974, %v1987
    %v1989 = vcombine.high %v1981, %v1988
    %v1991 = vunpack.c.l.s4 1966171168
    %v1992 = vunpack.c.0.s8 %v1991
    %v1993 = vlaneseq
    %v1994 = vshrl.u32 %v1993, 7
    %v1995 = vsub.s32 %v1992, %v1994
    %v1996 = vrot.slane %v1989, %v1995
    %s1998 = scalar_lea.vmem [#allocation13], 1
    %1999 = vst.msk [vmem:[%s1998] ss:$2 sm:$0xf] %vm1967, %v1996
    %v2000 = vld [vmem:[#allocation5] sm:$0xf]
    %v2001 = vld [vmem:[#allocation5 + $0x4] sm:$0xf]
    %v2002 = vld [vmem:[#allocation5 + $0x8] sm:$0xf]
    %v2003 = vld [vmem:[#allocation5 + $0xc] sm:$0xf]
    %v2004 = vld [vmem:[#allocation5 + $0x10] sm:$0xf]
    %v2005 = vld [vmem:[#allocation5 + $0x14] sm:$0xf]
    %v2006 = vld [vmem:[#allocation5 + $0x18] sm:$0xf]
    %v2007 = vld [vmem:[#allocation5 + $0x1c] sm:$0xf]
    %v2008 = vld [vmem:[#allocation5 + $0x20] sm:$0xf]
    %v2009 = vld [vmem:[#allocation5 + $0x24] sm:$0xf]
    %v2010 = vld [vmem:[#allocation5 + $0x28] sm:$0xf]
    %v2011 = vld [vmem:[#allocation5 + $0x2c] sm:$0xf]
    %v2012 = vld [vmem:[#allocation5 + $0x30] sm:$0xf]
    %v2013 = vld [vmem:[#allocation5 + $0x34] sm:$0xf]
    %v2014 = vld [vmem:[#allocation5 + $0x38] sm:$0xf]
    %v2015 = vld [vmem:[#allocation5 + $0x3c] sm:$0xf]
    %v2016 = vld [vmem:[#allocation5 + $0x40] sm:$0xf]
    %v2017 = vld [vmem:[#allocation5 + $0x44] sm:$0xf]
    %v2018 = vld [vmem:[#allocation5 + $0x48] sm:$0xf]
    %v2019 = vld [vmem:[#allocation5 + $0x4c] sm:$0xf]
    %v2020 = vld [vmem:[#allocation5 + $0x50] sm:$0xf]
    %v2021 = vld [vmem:[#allocation5 + $0x54] sm:$0xf]
    %v2022 = vld [vmem:[#allocation5 + $0x58] sm:$0xf]
    %v2023 = vld [vmem:[#allocation5 + $0x5c] sm:$0xf]
    %v2024 = vld [vmem:[#allocation5 + $0x60] sm:$0xf]
    %v2025 = vld [vmem:[#allocation5 + $0x64] sm:$0xf]
    %v2026 = vld [vmem:[#allocation5 + $0x68] sm:$0xf]
    %v2027 = vld [vmem:[#allocation5 + $0x6c] sm:$0xf]
    %v2028 = vld [vmem:[#allocation5 + $0x70] sm:$0xf]
    %v2029 = vld [vmem:[#allocation5 + $0x74] sm:$0xf]
    %v2030 = vld [vmem:[#allocation5 + $0x78] sm:$0xf]
    %v2031 = vld [vmem:[#allocation5 + $0x7c] sm:$0xf]
    %v2032 = vld [vmem:[#allocation5 + $0x80] sm:$0xf]
    %v2033 = vld [vmem:[#allocation5 + $0x84] sm:$0xf]
    %v2034 = vld [vmem:[#allocation5 + $0x88] sm:$0xf]
    %v2035 = vld [vmem:[#allocation5 + $0x8c] sm:$0xf]
    %v2036 = vld [vmem:[#allocation5 + $0x90] sm:$0xf]
    %v2037 = vld [vmem:[#allocation5 + $0x94] sm:$0xf]
    %v2038 = vld [vmem:[#allocation5 + $0x98] sm:$0xf]
    %v2039 = vld [vmem:[#allocation5 + $0x9c] sm:$0xf]
    %v2040 = vld [vmem:[#allocation5 + $0xa0] sm:$0xf]
    %v2041 = vld [vmem:[#allocation5 + $0xa4] sm:$0xf]
    %v2042 = vld [vmem:[#allocation5 + $0xa8] sm:$0xf]
    %v2043 = vld [vmem:[#allocation5 + $0xac] sm:$0xf]
    %v2044 = vld [vmem:[#allocation5 + $0xb0] sm:$0xf]
    %v2045 = vld [vmem:[#allocation5 + $0xb4] sm:$0xf]
    %v2046 = vld [vmem:[#allocation5 + $0xb8] sm:$0xf]
    %v2047 = vld [vmem:[#allocation5 + $0xbc] sm:$0xf]
    %v2048 = vld [vmem:[#allocation5 + $0xc0] sm:$0xf]
    %v2049 = vld [vmem:[#allocation5 + $0xc4] sm:$0xf]
    %v2050 = vld [vmem:[#allocation5 + $0xc8] sm:$0xf]
    %v2051 = vld [vmem:[#allocation5 + $0xcc] sm:$0xf]
    %v2052 = vld [vmem:[#allocation5 + $0xd0] sm:$0xf]
    %v2053 = vld [vmem:[#allocation5 + $0xd4] sm:$0xf]
    %v2054 = vld [vmem:[#allocation5 + $0xd8] sm:$0xf]
    %v2055 = vld [vmem:[#allocation5 + $0xdc] sm:$0xf]
    %v2056 = vld [vmem:[#allocation5 + $0xe0] sm:$0xf]
    %v2057 = vld [vmem:[#allocation5 + $0xe4] sm:$0xf]
    %v2058 = vld [vmem:[#allocation5 + $0xe8] sm:$0xf]
    %v2059 = vld [vmem:[#allocation5 + $0xec] sm:$0xf]
    %v2060 = vld [vmem:[#allocation5 + $0xf0] sm:$0xf]
    %v2061 = vld [vmem:[#allocation5 + $0xf4] sm:$0xf]
    %v2062 = vld [vmem:[#allocation5 + $0xf8] sm:$0xf]
    %v2063 = vld [vmem:[#allocation5 + $0xfc] sm:$0xf]
    %v2064 = vld [vmem:[#allocation11] sm:$0x1]
    %v2065 = vpack.c.bf16 %v2064, %v2064
    %v2066 = vpack.c.bf16 %v1716, %v1715
    %v2067 = vpack.c.bf16 %v1718, %v1717
    %v2068 = vpack.c.bf16 %v1720, %v1719
    %v2069 = vpack.c.bf16 %v1722, %v1721
    %v2070 = vpack.c.bf16 %v1724, %v1723
    %v2071 = vpack.c.bf16 %v1726, %v1725
    %v2072 = vpack.c.bf16 %v1728, %v1727
    %v2073 = vpack.c.bf16 %v1730, %v1729
    %v2074 = vpack.c.bf16 %v1732, %v1731
    %v2075 = vpack.c.bf16 %v1734, %v1733
    %v2076 = vpack.c.bf16 %v1736, %v1735
    %v2077 = vpack.c.bf16 %v1738, %v1737
    %v2078 = vpack.c.bf16 %v1740, %v1739
    %v2079 = vpack.c.bf16 %v1742, %v1741
    %v2080 = vpack.c.bf16 %v1744, %v1743
    %v2081 = vpack.c.bf16 %v1746, %v1745
    %v2082 = vpack.c.bf16 %v1748, %v1747
    %v2083 = vpack.c.bf16 %v1750, %v1749
    %v2084 = vpack.c.bf16 %v1752, %v1751
    %v2085 = vpack.c.bf16 %v1754, %v1753
    %v2086 = vpack.c.bf16 %v1756, %v1755
    %v2087 = vpack.c.bf16 %v1758, %v1757
    %v2088 = vpack.c.bf16 %v1760, %v1759
    %v2089 = vpack.c.bf16 %v1762, %v1761
    %v2090 = vpack.c.bf16 %v1764, %v1763
    %v2091 = vpack.c.bf16 %v1766, %v1765
    %v2092 = vpack.c.bf16 %v1768, %v1767
    %v2093 = vpack.c.bf16 %v1770, %v1769
    %v2094 = vpack.c.bf16 %v1772, %v1771
    %v2095 = vpack.c.bf16 %v1774, %v1773
    %v2096 = vpack.c.bf16 %v1776, %v1775
    %v2097 = vpack.c.bf16 %v1778, %v1777
    %v2099 = vpack.i.b16 %v2065, %v2065
    %v2101 = vlaneseq
    %v2102 = vshrl.u32 %v2101, 7
    %v2103 = vsub.s32 0, %v2102
    %v2104 = vrot.slane %v2099, %v2103
    %v2169 = vunpack.c.l.b16 %v2000
    %v2170 = vunpack.c.l.b16 %v2001
    %v2171 = vunpack.c.l.b16 %v2002
    %v2172 = vunpack.c.l.b16 %v2003
    %v2173 = vunpack.c.l.b16 %v2004
    %v2174 = vunpack.c.l.b16 %v2005
    %v2175 = vunpack.c.l.b16 %v2006
    %v2176 = vunpack.c.l.b16 %v2007
    %v2177 = vunpack.c.l.b16 %v2008
    %v2178 = vunpack.c.l.b16 %v2009
    %v2179 = vunpack.c.l.b16 %v2010
    %v2180 = vunpack.c.l.b16 %v2011
    %v2181 = vunpack.c.l.b16 %v2012
    %v2182 = vunpack.c.l.b16 %v2013
    %v2183 = vunpack.c.l.b16 %v2014
    %v2184 = vunpack.c.l.b16 %v2015
    %v2185 = vunpack.c.l.b16 %v2016
    %v2186 = vunpack.c.l.b16 %v2017
    %v2187 = vunpack.c.l.b16 %v2018
    %v2188 = vunpack.c.l.b16 %v2019
    %v2189 = vunpack.c.l.b16 %v2020
    %v2190 = vunpack.c.l.b16 %v2021
    %v2191 = vunpack.c.l.b16 %v2022
    %v2192 = vunpack.c.l.b16 %v2023
    %v2193 = vunpack.c.l.b16 %v2024
    %v2194 = vunpack.c.l.b16 %v2025
    %v2195 = vunpack.c.l.b16 %v2026
    %v2196 = vunpack.c.l.b16 %v2027
    %v2197 = vunpack.c.l.b16 %v2028
    %v2198 = vunpack.c.l.b16 %v2029
    %v2199 = vunpack.c.l.b16 %v2030
    %v2200 = vunpack.c.l.b16 %v2031
    %v2201 = vunpack.c.l.b16 %v2032
    %v2202 = vunpack.c.l.b16 %v2033
    %v2203 = vunpack.c.l.b16 %v2034
    %v2204 = vunpack.c.l.b16 %v2035
    %v2205 = vunpack.c.l.b16 %v2036
    %v2206 = vunpack.c.l.b16 %v2037
    %v2207 = vunpack.c.l.b16 %v2038
    %v2208 = vunpack.c.l.b16 %v2039
    %v2209 = vunpack.c.l.b16 %v2040
    %v2210 = vunpack.c.l.b16 %v2041
    %v2211 = vunpack.c.l.b16 %v2042
    %v2212 = vunpack.c.l.b16 %v2043
    %v2213 = vunpack.c.l.b16 %v2044
    %v2214 = vunpack.c.l.b16 %v2045
    %v2215 = vunpack.c.l.b16 %v2046
    %v2216 = vunpack.c.l.b16 %v2047
    %v2217 = vunpack.c.l.b16 %v2048
    %v2218 = vunpack.c.l.b16 %v2049
    %v2219 = vunpack.c.l.b16 %v2050
    %v2220 = vunpack.c.l.b16 %v2051
    %v2221 = vunpack.c.l.b16 %v2052
    %v2222 = vunpack.c.l.b16 %v2053
    %v2223 = vunpack.c.l.b16 %v2054
    %v2224 = vunpack.c.l.b16 %v2055
    %v2225 = vunpack.c.l.b16 %v2056
    %v2226 = vunpack.c.l.b16 %v2057
    %v2227 = vunpack.c.l.b16 %v2058
    %v2228 = vunpack.c.l.b16 %v2059
    %v2229 = vunpack.c.l.b16 %v2060
    %v2230 = vunpack.c.l.b16 %v2061
    %v2231 = vunpack.c.l.b16 %v2062
    %v2232 = vunpack.c.l.b16 %v2063
    %v2233 = vpack.c.b16 %v2170, %v2169
    %v2234 = vpack.c.b16 %v2172, %v2171
    %v2235 = vpack.c.b16 %v2174, %v2173
    %v2236 = vpack.c.b16 %v2176, %v2175
    %v2237 = vpack.c.b16 %v2178, %v2177
    %v2238 = vpack.c.b16 %v2180, %v2179
    %v2239 = vpack.c.b16 %v2182, %v2181
    %v2240 = vpack.c.b16 %v2184, %v2183
    %v2241 = vpack.c.b16 %v2186, %v2185
    %v2242 = vpack.c.b16 %v2188, %v2187
    %v2243 = vpack.c.b16 %v2190, %v2189
    %v2244 = vpack.c.b16 %v2192, %v2191
    %v2245 = vpack.c.b16 %v2194, %v2193
    %v2246 = vpack.c.b16 %v2196, %v2195
    %v2247 = vpack.c.b16 %v2198, %v2197
    %v2248 = vpack.c.b16 %v2200, %v2199
    %v2249 = vpack.c.b16 %v2202, %v2201
    %v2250 = vpack.c.b16 %v2204, %v2203
    %v2251 = vpack.c.b16 %v2206, %v2205
    %v2252 = vpack.c.b16 %v2208, %v2207
    %v2253 = vpack.c.b16 %v2210, %v2209
    %v2254 = vpack.c.b16 %v2212, %v2211
    %v2255 = vpack.c.b16 %v2214, %v2213
    %v2256 = vpack.c.b16 %v2216, %v2215
    %v2257 = vpack.c.b16 %v2218, %v2217
    %v2258 = vpack.c.b16 %v2220, %v2219
    %v2259 = vpack.c.b16 %v2222, %v2221
    %v2260 = vpack.c.b16 %v2224, %v2223
    %v2261 = vpack.c.b16 %v2226, %v2225
    %v2262 = vpack.c.b16 %v2228, %v2227
    %v2263 = vpack.c.b16 %v2230, %v2229
    %v2264 = vpack.c.b16 %v2232, %v2231
    %v2297 = vsub.bf16 %v2104, %v2233
    %v2298 = vsub.bf16 %v2104, %v2234
    %v2299 = vsub.bf16 %v2104, %v2235
    %v2300 = vsub.bf16 %v2104, %v2236
    %v2301 = vsub.bf16 %v2104, %v2237
    %v2302 = vsub.bf16 %v2104, %v2238
    %v2303 = vsub.bf16 %v2104, %v2239
    %v2304 = vsub.bf16 %v2104, %v2240
    %v2305 = vsub.bf16 %v2104, %v2241
    %v2306 = vsub.bf16 %v2104, %v2242
    %v2307 = vsub.bf16 %v2104, %v2243
    %v2308 = vsub.bf16 %v2104, %v2244
    %v2309 = vsub.bf16 %v2104, %v2245
    %v2310 = vsub.bf16 %v2104, %v2246
    %v2311 = vsub.bf16 %v2104, %v2247
    %v2312 = vsub.bf16 %v2104, %v2248
    %v2313 = vsub.bf16 %v2104, %v2249
    %v2314 = vsub.bf16 %v2104, %v2250
    %v2315 = vsub.bf16 %v2104, %v2251
    %v2316 = vsub.bf16 %v2104, %v2252
    %v2317 = vsub.bf16 %v2104, %v2253
    %v2318 = vsub.bf16 %v2104, %v2254
    %v2319 = vsub.bf16 %v2104, %v2255
    %v2320 = vsub.bf16 %v2104, %v2256
    %v2321 = vsub.bf16 %v2104, %v2257
    %v2322 = vsub.bf16 %v2104, %v2258
    %v2323 = vsub.bf16 %v2104, %v2259
    %v2324 = vsub.bf16 %v2104, %v2260
    %v2325 = vsub.bf16 %v2104, %v2261
    %v2326 = vsub.bf16 %v2104, %v2262
    %v2327 = vsub.bf16 %v2104, %v2263
    %v2328 = vsub.bf16 %v2104, %v2264
    %2330 = vset.pattern.permute.xlu0 0
    %2331 = vperm.xlu0 %2330, %v2066
    %v2332 = vpop.permute.xlu0 %2331
    %2335 = vset.pattern.permute.xlu0 0
    %2336 = vperm.xlu0 %2335, %v2067
    %v2337 = vpop.permute.xlu0 %2336
    %2340 = vset.pattern.permute.xlu0 0
    %2341 = vperm.xlu0 %2340, %v2068
    %v2342 = vpop.permute.xlu0 %2341
    %2345 = vset.pattern.permute.xlu0 0
    %2346 = vperm.xlu0 %2345, %v2069
    %v2347 = vpop.permute.xlu0 %2346
    %2350 = vset.pattern.permute.xlu0 0
    %2351 = vperm.xlu0 %2350, %v2070
    %v2352 = vpop.permute.xlu0 %2351
    %2355 = vset.pattern.permute.xlu0 0
    %2356 = vperm.xlu0 %2355, %v2071
    %v2357 = vpop.permute.xlu0 %2356
    %2360 = vset.pattern.permute.xlu0 0
    %2361 = vperm.xlu0 %2360, %v2072
    %v2362 = vpop.permute.xlu0 %2361
    %2365 = vset.pattern.permute.xlu0 0
    %2366 = vperm.xlu0 %2365, %v2073
    %v2367 = vpop.permute.xlu0 %2366
    %2370 = vset.pattern.permute.xlu0 0
    %2371 = vperm.xlu0 %2370, %v2074
    %v2372 = vpop.permute.xlu0 %2371
    %2375 = vset.pattern.permute.xlu0 0
    %2376 = vperm.xlu0 %2375, %v2075
    %v2377 = vpop.permute.xlu0 %2376
    %2380 = vset.pattern.permute.xlu0 0
    %2381 = vperm.xlu0 %2380, %v2076
    %v2382 = vpop.permute.xlu0 %2381
    %2385 = vset.pattern.permute.xlu0 0
    %2386 = vperm.xlu0 %2385, %v2077
    %v2387 = vpop.permute.xlu0 %2386
    %2390 = vset.pattern.permute.xlu0 0
    %2391 = vperm.xlu0 %2390, %v2078
    %v2392 = vpop.permute.xlu0 %2391
    %2395 = vset.pattern.permute.xlu0 0
    %2396 = vperm.xlu0 %2395, %v2079
    %v2397 = vpop.permute.xlu0 %2396
    %2400 = vset.pattern.permute.xlu0 0
    %2401 = vperm.xlu0 %2400, %v2080
    %v2402 = vpop.permute.xlu0 %2401
    %2405 = vset.pattern.permute.xlu0 0
    %2406 = vperm.xlu0 %2405, %v2081
    %v2407 = vpop.permute.xlu0 %2406
    %2410 = vset.pattern.permute.xlu0 0
    %2411 = vperm.xlu0 %2410, %v2082
    %v2412 = vpop.permute.xlu0 %2411
    %2415 = vset.pattern.permute.xlu0 0
    %2416 = vperm.xlu0 %2415, %v2083
    %v2417 = vpop.permute.xlu0 %2416
    %2420 = vset.pattern.permute.xlu0 0
    %2421 = vperm.xlu0 %2420, %v2084
    %v2422 = vpop.permute.xlu0 %2421
    %2425 = vset.pattern.permute.xlu0 0
    %2426 = vperm.xlu0 %2425, %v2085
    %v2427 = vpop.permute.xlu0 %2426
    %2430 = vset.pattern.permute.xlu0 0
    %2431 = vperm.xlu0 %2430, %v2086
    %v2432 = vpop.permute.xlu0 %2431
    %2435 = vset.pattern.permute.xlu0 0
    %2436 = vperm.xlu0 %2435, %v2087
    %v2437 = vpop.permute.xlu0 %2436
    %2440 = vset.pattern.permute.xlu0 0
    %2441 = vperm.xlu0 %2440, %v2088
    %v2442 = vpop.permute.xlu0 %2441
    %2445 = vset.pattern.permute.xlu0 0
    %2446 = vperm.xlu0 %2445, %v2089
    %v2447 = vpop.permute.xlu0 %2446
    %2450 = vset.pattern.permute.xlu0 0
    %2451 = vperm.xlu0 %2450, %v2090
    %v2452 = vpop.permute.xlu0 %2451
    %2455 = vset.pattern.permute.xlu0 0
    %2456 = vperm.xlu0 %2455, %v2091
    %v2457 = vpop.permute.xlu0 %2456
    %2460 = vset.pattern.permute.xlu0 0
    %2461 = vperm.xlu0 %2460, %v2092
    %v2462 = vpop.permute.xlu0 %2461
    %2465 = vset.pattern.permute.xlu0 0
    %2466 = vperm.xlu0 %2465, %v2093
    %v2467 = vpop.permute.xlu0 %2466
    %2470 = vset.pattern.permute.xlu0 0
    %2471 = vperm.xlu0 %2470, %v2094
    %v2472 = vpop.permute.xlu0 %2471
    %2475 = vset.pattern.permute.xlu0 0
    %2476 = vperm.xlu0 %2475, %v2095
    %v2477 = vpop.permute.xlu0 %2476
    %2480 = vset.pattern.permute.xlu0 0
    %2481 = vperm.xlu0 %2480, %v2096
    %v2482 = vpop.permute.xlu0 %2481
    %2485 = vset.pattern.permute.xlu0 0
    %2486 = vperm.xlu0 %2485, %v2097
    %v2487 = vpop.permute.xlu0 %2486
    %v2489 = vmul.bf16 %v2332, %v2297
    %v2490 = vmul.bf16 %v2337, %v2298
    %v2491 = vmul.bf16 %v2342, %v2299
    %v2492 = vmul.bf16 %v2347, %v2300
    %v2493 = vmul.bf16 %v2352, %v2301
    %v2494 = vmul.bf16 %v2357, %v2302
    %v2495 = vmul.bf16 %v2362, %v2303
    %v2496 = vmul.bf16 %v2367, %v2304
    %v2497 = vmul.bf16 %v2372, %v2305
    %v2498 = vmul.bf16 %v2377, %v2306
    %v2499 = vmul.bf16 %v2382, %v2307
    %v2500 = vmul.bf16 %v2387, %v2308
    %v2501 = vmul.bf16 %v2392, %v2309
    %v2502 = vmul.bf16 %v2397, %v2310
    %v2503 = vmul.bf16 %v2402, %v2311
    %v2504 = vmul.bf16 %v2407, %v2312
    %v2505 = vmul.bf16 %v2412, %v2313
    %v2506 = vmul.bf16 %v2417, %v2314
    %v2507 = vmul.bf16 %v2422, %v2315
    %v2508 = vmul.bf16 %v2427, %v2316
    %v2509 = vmul.bf16 %v2432, %v2317
    %v2510 = vmul.bf16 %v2437, %v2318
    %v2511 = vmul.bf16 %v2442, %v2319
    %v2512 = vmul.bf16 %v2447, %v2320
    %v2513 = vmul.bf16 %v2452, %v2321
    %v2514 = vmul.bf16 %v2457, %v2322
    %v2515 = vmul.bf16 %v2462, %v2323
    %v2516 = vmul.bf16 %v2467, %v2324
    %v2517 = vmul.bf16 %v2472, %v2325
    %v2518 = vmul.bf16 %v2477, %v2326
    %v2519 = vmul.bf16 %v2482, %v2327
    %v2520 = vmul.bf16 %v2487, %v2328
    %v2553 = vunpack.c.l.b16 %v2489
    %v2554 = vunpack.c.h.b16 %v2489
    %v2555 = vunpack.c.l.b16 %v2490
    %v2556 = vunpack.c.h.b16 %v2490
    %v2557 = vunpack.c.l.b16 %v2491
    %v2558 = vunpack.c.h.b16 %v2491
    %v2559 = vunpack.c.l.b16 %v2492
    %v2560 = vunpack.c.h.b16 %v2492
    %v2561 = vunpack.c.l.b16 %v2493
    %v2562 = vunpack.c.h.b16 %v2493
    %v2563 = vunpack.c.l.b16 %v2494
    %v2564 = vunpack.c.h.b16 %v2494
    %v2565 = vunpack.c.l.b16 %v2495
    %v2566 = vunpack.c.h.b16 %v2495
    %v2567 = vunpack.c.l.b16 %v2496
    %v2568 = vunpack.c.h.b16 %v2496
    %v2569 = vunpack.c.l.b16 %v2497
    %v2570 = vunpack.c.h.b16 %v2497
    %v2571 = vunpack.c.l.b16 %v2498
    %v2572 = vunpack.c.h.b16 %v2498
    %v2573 = vunpack.c.l.b16 %v2499
    %v2574 = vunpack.c.h.b16 %v2499
    %v2575 = vunpack.c.l.b16 %v2500
    %v2576 = vunpack.c.h.b16 %v2500
    %v2577 = vunpack.c.l.b16 %v2501
    %v2578 = vunpack.c.h.b16 %v2501
    %v2579 = vunpack.c.l.b16 %v2502
    %v2580 = vunpack.c.h.b16 %v2502
    %v2581 = vunpack.c.l.b16 %v2503
    %v2582 = vunpack.c.h.b16 %v2503
    %v2583 = vunpack.c.l.b16 %v2504
    %v2584 = vunpack.c.h.b16 %v2504
    %v2585 = vunpack.c.l.b16 %v2505
    %v2586 = vunpack.c.h.b16 %v2505
    %v2587 = vunpack.c.l.b16 %v2506
    %v2588 = vunpack.c.h.b16 %v2506
    %v2589 = vunpack.c.l.b16 %v2507
    %v2590 = vunpack.c.h.b16 %v2507
    %v2591 = vunpack.c.l.b16 %v2508
    %v2592 = vunpack.c.h.b16 %v2508
    %v2593 = vunpack.c.l.b16 %v2509
    %v2594 = vunpack.c.h.b16 %v2509
    %v2595 = vunpack.c.l.b16 %v2510
    %v2596 = vunpack.c.h.b16 %v2510
    %v2597 = vunpack.c.l.b16 %v2511
    %v2598 = vunpack.c.h.b16 %v2511
    %v2599 = vunpack.c.l.b16 %v2512
    %v2600 = vunpack.c.h.b16 %v2512
    %v2601 = vunpack.c.l.b16 %v2513
    %v2602 = vunpack.c.h.b16 %v2513
    %v2603 = vunpack.c.l.b16 %v2514
    %v2604 = vunpack.c.h.b16 %v2514
    %v2605 = vunpack.c.l.b16 %v2515
    %v2606 = vunpack.c.h.b16 %v2515
    %v2607 = vunpack.c.l.b16 %v2516
    %v2608 = vunpack.c.h.b16 %v2516
    %v2609 = vunpack.c.l.b16 %v2517
    %v2610 = vunpack.c.h.b16 %v2517
    %v2611 = vunpack.c.l.b16 %v2518
    %v2612 = vunpack.c.h.b16 %v2518
    %v2613 = vunpack.c.l.b16 %v2519
    %v2614 = vunpack.c.h.b16 %v2519
    %v2615 = vunpack.c.l.b16 %v2520
    %v2616 = vunpack.c.h.b16 %v2520
    %v2617 = vpack.c.b16 %v2553, %v2553
    %v2618 = vpack.c.b16 %v2554, %v2554
    %v2619 = vpack.c.b16 %v2555, %v2555
    %v2620 = vpack.c.b16 %v2556, %v2556
    %v2621 = vpack.c.b16 %v2557, %v2557
    %v2622 = vpack.c.b16 %v2558, %v2558
    %v2623 = vpack.c.b16 %v2559, %v2559
    %v2624 = vpack.c.b16 %v2560, %v2560
    %v2625 = vpack.c.b16 %v2561, %v2561
    %v2626 = vpack.c.b16 %v2562, %v2562
    %v2627 = vpack.c.b16 %v2563, %v2563
    %v2628 = vpack.c.b16 %v2564, %v2564
    %v2629 = vpack.c.b16 %v2565, %v2565
    %v2630 = vpack.c.b16 %v2566, %v2566
    %v2631 = vpack.c.b16 %v2567, %v2567
    %v2632 = vpack.c.b16 %v2568, %v2568
    %v2633 = vpack.c.b16 %v2569, %v2569
    %v2634 = vpack.c.b16 %v2570, %v2570
    %v2635 = vpack.c.b16 %v2571, %v2571
    %v2636 = vpack.c.b16 %v2572, %v2572
    %v2637 = vpack.c.b16 %v2573, %v2573
    %v2638 = vpack.c.b16 %v2574, %v2574
    %v2639 = vpack.c.b16 %v2575, %v2575
    %v2640 = vpack.c.b16 %v2576, %v2576
    %v2641 = vpack.c.b16 %v2577, %v2577
    %v2642 = vpack.c.b16 %v2578, %v2578
    %v2643 = vpack.c.b16 %v2579, %v2579
    %v2644 = vpack.c.b16 %v2580, %v2580
    %v2645 = vpack.c.b16 %v2581, %v2581
    %v2646 = vpack.c.b16 %v2582, %v2582
    %v2647 = vpack.c.b16 %v2583, %v2583
    %v2648 = vpack.c.b16 %v2584, %v2584
    %v2649 = vpack.c.b16 %v2585, %v2585
    %v2650 = vpack.c.b16 %v2586, %v2586
    %v2651 = vpack.c.b16 %v2587, %v2587
    %v2652 = vpack.c.b16 %v2588, %v2588
    %v2653 = vpack.c.b16 %v2589, %v2589
    %v2654 = vpack.c.b16 %v2590, %v2590
    %v2655 = vpack.c.b16 %v2591, %v2591
    %v2656 = vpack.c.b16 %v2592, %v2592
    %v2657 = vpack.c.b16 %v2593, %v2593
    %v2658 = vpack.c.b16 %v2594, %v2594
    %v2659 = vpack.c.b16 %v2595, %v2595
    %v2660 = vpack.c.b16 %v2596, %v2596
    %v2661 = vpack.c.b16 %v2597, %v2597
    %v2662 = vpack.c.b16 %v2598, %v2598
    %v2663 = vpack.c.b16 %v2599, %v2599
    %v2664 = vpack.c.b16 %v2600, %v2600
    %v2665 = vpack.c.b16 %v2601, %v2601
    %v2666 = vpack.c.b16 %v2602, %v2602
    %v2667 = vpack.c.b16 %v2603, %v2603
    %v2668 = vpack.c.b16 %v2604, %v2604
    %v2669 = vpack.c.b16 %v2605, %v2605
    %v2670 = vpack.c.b16 %v2606, %v2606
    %v2671 = vpack.c.b16 %v2607, %v2607
    %v2672 = vpack.c.b16 %v2608, %v2608
    %v2673 = vpack.c.b16 %v2609, %v2609
    %v2674 = vpack.c.b16 %v2610, %v2610
    %v2675 = vpack.c.b16 %v2611, %v2611
    %v2676 = vpack.c.b16 %v2612, %v2612
    %v2677 = vpack.c.b16 %v2613, %v2613
    %v2678 = vpack.c.b16 %v2614, %v2614
    %v2679 = vpack.c.b16 %v2615, %v2615
    %v2680 = vpack.c.b16 %v2616, %v2616
    %v2745 = vadd.bf16 %v2000, %v2617
    %v2746 = vadd.bf16 %v2001, %v2618
    %v2747 = vadd.bf16 %v2002, %v2619
    %v2748 = vadd.bf16 %v2003, %v2620
    %v2749 = vadd.bf16 %v2004, %v2621
    %v2750 = vadd.bf16 %v2005, %v2622
    %v2751 = vadd.bf16 %v2006, %v2623
    %v2752 = vadd.bf16 %v2007, %v2624
    %v2753 = vadd.bf16 %v2008, %v2625
    %v2754 = vadd.bf16 %v2009, %v2626
    %v2755 = vadd.bf16 %v2010, %v2627
    %v2756 = vadd.bf16 %v2011, %v2628
    %v2757 = vadd.bf16 %v2012, %v2629
    %v2758 = vadd.bf16 %v2013, %v2630
    %v2759 = vadd.bf16 %v2014, %v2631
    %v2760 = vadd.bf16 %v2015, %v2632
    %v2761 = vadd.bf16 %v2016, %v2633
    %v2762 = vadd.bf16 %v2017, %v2634
    %v2763 = vadd.bf16 %v2018, %v2635
    %v2764 = vadd.bf16 %v2019, %v2636
    %v2765 = vadd.bf16 %v2020, %v2637
    %v2766 = vadd.bf16 %v2021, %v2638
    %v2767 = vadd.bf16 %v2022, %v2639
    %v2768 = vadd.bf16 %v2023, %v2640
    %v2769 = vadd.bf16 %v2024, %v2641
    %v2770 = vadd.bf16 %v2025, %v2642
    %v2771 = vadd.bf16 %v2026, %v2643
    %v2772 = vadd.bf16 %v2027, %v2644
    %v2773 = vadd.bf16 %v2028, %v2645
    %v2774 = vadd.bf16 %v2029, %v2646
    %v2775 = vadd.bf16 %v2030, %v2647
    %v2776 = vadd.bf16 %v2031, %v2648
    %v2777 = vadd.bf16 %v2032, %v2649
    %v2778 = vadd.bf16 %v2033, %v2650
    %v2779 = vadd.bf16 %v2034, %v2651
    %v2780 = vadd.bf16 %v2035, %v2652
    %v2781 = vadd.bf16 %v2036, %v2653
    %v2782 = vadd.bf16 %v2037, %v2654
    %v2783 = vadd.bf16 %v2038, %v2655
    %v2784 = vadd.bf16 %v2039, %v2656
    %v2785 = vadd.bf16 %v2040, %v2657
    %v2786 = vadd.bf16 %v2041, %v2658
    %v2787 = vadd.bf16 %v2042, %v2659
    %v2788 = vadd.bf16 %v2043, %v2660
    %v2789 = vadd.bf16 %v2044, %v2661
    %v2790 = vadd.bf16 %v2045, %v2662
    %v2791 = vadd.bf16 %v2046, %v2663
    %v2792 = vadd.bf16 %v2047, %v2664
    %v2793 = vadd.bf16 %v2048, %v2665
    %v2794 = vadd.bf16 %v2049, %v2666
    %v2795 = vadd.bf16 %v2050, %v2667
    %v2796 = vadd.bf16 %v2051, %v2668
    %v2797 = vadd.bf16 %v2052, %v2669
    %v2798 = vadd.bf16 %v2053, %v2670
    %v2799 = vadd.bf16 %v2054, %v2671
    %v2800 = vadd.bf16 %v2055, %v2672
    %v2801 = vadd.bf16 %v2056, %v2673
    %v2802 = vadd.bf16 %v2057, %v2674
    %v2803 = vadd.bf16 %v2058, %v2675
    %v2804 = vadd.bf16 %v2059, %v2676
    %v2805 = vadd.bf16 %v2060, %v2677
    %v2806 = vadd.bf16 %v2061, %v2678
    %v2807 = vadd.bf16 %v2062, %v2679
    %v2808 = vadd.bf16 %v2063, %v2680
    %vm2809 = vcmask 519168
    %2810 = vst.msk [vmem:[#allocation14] sm:$0xf] %vm2809, %v2745
    %2811 = vst.msk [vmem:[#allocation14 + $0x4] sm:$0xf] %vm2809, %v2746
    %2812 = vst.msk [vmem:[#allocation14 + $0x8] sm:$0xf] %vm2809, %v2747
    %2813 = vst.msk [vmem:[#allocation14 + $0xc] sm:$0xf] %vm2809, %v2748
    %2814 = vst.msk [vmem:[#allocation14 + $0x10] sm:$0xf] %vm2809, %v2749
    %2815 = vst.msk [vmem:[#allocation14 + $0x14] sm:$0xf] %vm2809, %v2750
    %2816 = vst.msk [vmem:[#allocation14 + $0x18] sm:$0xf] %vm2809, %v2751
    %2817 = vst.msk [vmem:[#allocation14 + $0x1c] sm:$0xf] %vm2809, %v2752
    %2818 = vst.msk [vmem:[#allocation14 + $0x20] sm:$0xf] %vm2809, %v2753
    %2819 = vst.msk [vmem:[#allocation14 + $0x24] sm:$0xf] %vm2809, %v2754
    %2820 = vst.msk [vmem:[#allocation14 + $0x28] sm:$0xf] %vm2809, %v2755
    %2821 = vst.msk [vmem:[#allocation14 + $0x2c] sm:$0xf] %vm2809, %v2756
    %2822 = vst.msk [vmem:[#allocation14 + $0x30] sm:$0xf] %vm2809, %v2757
    %2823 = vst.msk [vmem:[#allocation14 + $0x34] sm:$0xf] %vm2809, %v2758
    %2824 = vst.msk [vmem:[#allocation14 + $0x38] sm:$0xf] %vm2809, %v2759
    %2825 = vst.msk [vmem:[#allocation14 + $0x3c] sm:$0xf] %vm2809, %v2760
    %2826 = vst.msk [vmem:[#allocation14 + $0x40] sm:$0xf] %vm2809, %v2761
    %2827 = vst.msk [vmem:[#allocation14 + $0x44] sm:$0xf] %vm2809, %v2762
    %2828 = vst.msk [vmem:[#allocation14 + $0x48] sm:$0xf] %vm2809, %v2763
    %2829 = vst.msk [vmem:[#allocation14 + $0x4c] sm:$0xf] %vm2809, %v2764
    %2830 = vst.msk [vmem:[#allocation14 + $0x50] sm:$0xf] %vm2809, %v2765
    %2831 = vst.msk [vmem:[#allocation14 + $0x54] sm:$0xf] %vm2809, %v2766
    %2832 = vst.msk [vmem:[#allocation14 + $0x58] sm:$0xf] %vm2809, %v2767
    %2833 = vst.msk [vmem:[#allocation14 + $0x5c] sm:$0xf] %vm2809, %v2768
    %2834 = vst.msk [vmem:[#allocation14 + $0x60] sm:$0xf] %vm2809, %v2769
    %2835 = vst.msk [vmem:[#allocation14 + $0x64] sm:$0xf] %vm2809, %v2770
    %2836 = vst.msk [vmem:[#allocation14 + $0x68] sm:$0xf] %vm2809, %v2771
    %2837 = vst.msk [vmem:[#allocation14 + $0x6c] sm:$0xf] %vm2809, %v2772
    %2838 = vst.msk [vmem:[#allocation14 + $0x70] sm:$0xf] %vm2809, %v2773
    %2839 = vst.msk [vmem:[#allocation14 + $0x74] sm:$0xf] %vm2809, %v2774
    %2840 = vst.msk [vmem:[#allocation14 + $0x78] sm:$0xf] %vm2809, %v2775
    %2841 = vst.msk [vmem:[#allocation14 + $0x7c] sm:$0xf] %vm2809, %v2776
    %2842 = vst.msk [vmem:[#allocation14 + $0x80] sm:$0xf] %vm2809, %v2777
    %2843 = vst.msk [vmem:[#allocation14 + $0x84] sm:$0xf] %vm2809, %v2778
    %2844 = vst.msk [vmem:[#allocation14 + $0x88] sm:$0xf] %vm2809, %v2779
    %2845 = vst.msk [vmem:[#allocation14 + $0x8c] sm:$0xf] %vm2809, %v2780
    %2846 = vst.msk [vmem:[#allocation14 + $0x90] sm:$0xf] %vm2809, %v2781
    %2847 = vst.msk [vmem:[#allocation14 + $0x94] sm:$0xf] %vm2809, %v2782
    %2848 = vst.msk [vmem:[#allocation14 + $0x98] sm:$0xf] %vm2809, %v2783
    %2849 = vst.msk [vmem:[#allocation14 + $0x9c] sm:$0xf] %vm2809, %v2784
    %2850 = vst.msk [vmem:[#allocation14 + $0xa0] sm:$0xf] %vm2809, %v2785
    %2851 = vst.msk [vmem:[#allocation14 + $0xa4] sm:$0xf] %vm2809, %v2786
    %2852 = vst.msk [vmem:[#allocation14 + $0xa8] sm:$0xf] %vm2809, %v2787
    %2853 = vst.msk [vmem:[#allocation14 + $0xac] sm:$0xf] %vm2809, %v2788
    %2854 = vst.msk [vmem:[#allocation14 + $0xb0] sm:$0xf] %vm2809, %v2789
    %2855 = vst.msk [vmem:[#allocation14 + $0xb4] sm:$0xf] %vm2809, %v2790
    %2856 = vst.msk [vmem:[#allocation14 + $0xb8] sm:$0xf] %vm2809, %v2791
    %2857 = vst.msk [vmem:[#allocation14 + $0xbc] sm:$0xf] %vm2809, %v2792
    %2858 = vst.msk [vmem:[#allocation14 + $0xc0] sm:$0xf] %vm2809, %v2793
    %2859 = vst.msk [vmem:[#allocation14 + $0xc4] sm:$0xf] %vm2809, %v2794
    %2860 = vst.msk [vmem:[#allocation14 + $0xc8] sm:$0xf] %vm2809, %v2795
    %2861 = vst.msk [vmem:[#allocation14 + $0xcc] sm:$0xf] %vm2809, %v2796
    %2862 = vst.msk [vmem:[#allocation14 + $0xd0] sm:$0xf] %vm2809, %v2797
    %2863 = vst.msk [vmem:[#allocation14 + $0xd4] sm:$0xf] %vm2809, %v2798
    %2864 = vst.msk [vmem:[#allocation14 + $0xd8] sm:$0xf] %vm2809, %v2799
    %2865 = vst.msk [vmem:[#allocation14 + $0xdc] sm:$0xf] %vm2809, %v2800
    %2866 = vst.msk [vmem:[#allocation14 + $0xe0] sm:$0xf] %vm2809, %v2801
    %2867 = vst.msk [vmem:[#allocation14 + $0xe4] sm:$0xf] %vm2809, %v2802
    %2868 = vst.msk [vmem:[#allocation14 + $0xe8] sm:$0xf] %vm2809, %v2803
    %2869 = vst.msk [vmem:[#allocation14 + $0xec] sm:$0xf] %vm2809, %v2804
    %2870 = vst.msk [vmem:[#allocation14 + $0xf0] sm:$0xf] %vm2809, %v2805
    %2871 = vst.msk [vmem:[#allocation14 + $0xf4] sm:$0xf] %vm2809, %v2806
    %2872 = vst.msk [vmem:[#allocation14 + $0xf8] sm:$0xf] %vm2809, %v2807
    %2873 = vst.msk [vmem:[#allocation14 + $0xfc] sm:$0xf] %vm2809, %v2808
    // Predicated region
    $region50: #{tpu_custom_call.1} parent=1 // pred_check
      _
    $region51: #{tpu_custom_call.1} parent=1 // pred_check_branch
      %2875 = sbr.rel (0) target = $region53
    $region52: #{tpu_custom_call.1} parent=1 // pred_region
      %s2877 = ssub.s32 128, 128
      %2878 = vsyncadd [#allocation4], %s2877
      %s2880 = sshll.u32 [#allocation13], 4
      %s2881 = int_to_ptr.vmem [resolvable:$true] %s2880
      %2883 = dma.vmem_to_hbm [thread:$0]  %s2881, 128, %s6, [#allocation4]
    $region53: #{tpu_custom_call.1} parent=1 // pred_fallthru
      _
    // Predicated region
    $region54: #{tpu_custom_call.1} parent=1 // pred_check
      _
    $region55: #{tpu_custom_call.1} parent=1 // pred_check_branch
      %2885 = sbr.rel (0) target = $region57
    $region56: #{tpu_custom_call.1} parent=1 // pred_region
      %s2887 = ssub.s32 4096, 4096
      %2888 = vsyncadd [#allocation15], %s2887
      %s2889 = sshll.u32 [#allocation14], 4
      %s2890 = int_to_ptr.vmem [resolvable:$true] %s2889
      %2895 = dma.vmem_to_hbm [thread:$0]  %s2890, 4096, %s7, [#allocation15], 64, 64, 4
    $region57: #{tpu_custom_call.1} parent=1 // pred_fallthru
      _
    // Predicated region
    $region58: #{tpu_custom_call.1} parent=1 // pred_check
      _
    $region59: #{tpu_custom_call.1} parent=1 // pred_check_branch
      %2897 = sbr.rel (0) target = $region61
    $region60: #{tpu_custom_call.1} parent=1 // pred_region
      %2898 = dma.done [#allocation4], 128
    $region61: #{tpu_custom_call.1} parent=1 // pred_fallthru
      _
    // Predicated region
    $region62: #{tpu_custom_call.1} parent=1 // pred_check
      _
    $region63: #{tpu_custom_call.1} parent=1 // pred_check_branch
      %2900 = sbr.rel (0) target = $region65
    $region64: #{tpu_custom_call.1} parent=1 // pred_region
      %2901 = dma.done [#allocation15], 4096
    $region65: #{tpu_custom_call.1} parent=1 // pred_fallthru
      _
    %2902 = vsyncpa [#allocation3], 1
    %2903 = vsyncpa [#allocation6], 1
    %2904 = vsyncpa [#allocation9], 1
    %2905 = vsyncpa [#allocation12], 1
    %2906 = vsyncpa [#allocation4], 1
    %2907 = vsyncpa [#allocation15], 1

</llo_original>
